<compile_context>
chip_gen: v6e
topology: v6e:2x2x1
jax: 0.10.0
libtpu: 0.0.40
codegen_flags: <defaults>
</compile_context>

<pallas_src>
import functools
import math

import jax
import jax.numpy as jnp
import numpy as np
from jax import lax
from jax.experimental import pallas as pl
from jax.experimental.pallas import tpu as pltpu


# ---------------------------------------------------------------------------
# One-time host-side parameter packing (runs once at init, NOT per forward)
# ---------------------------------------------------------------------------
def _pack_conv(w, w_in):
    """Fold a (OC, C, 5, 5) conv weight into a single matmul matrix.

    Returns G of shape (5*C*w_in, OC*ow) with
        G[ky*C*w_in + c*w_in + ox + kx, oc*ow + ox] = w[oc, c, ky, kx]
    so that, with activations stored h-major as a[h*B + b, c*w_in + x] and the
    in-kernel LHS built as the lane-concat of the 5 ky-shifted row slices,
    the whole valid 5x5 conv is ONE LHS @ G matmul.
    """
    w = np.asarray(w, np.float32)
    oc, c, kh, kw = w.shape
    ow = w_in - kw + 1
    g = np.zeros((kh, c, w_in, oc, ow), np.float32)
    for ky in range(kh):
        for kx in range(kw):
            wt = w[:, :, ky, kx].T                      # (C, OC)
            for ox in range(ow):
                g[ky, :, ox + kx, :, ox] = wt
    return jnp.asarray(g.reshape(kh * c * w_in, oc * ow))


def _pack_colpool(c, w):
    """Column half of the 2x2/2 avg-pool as a constant (C*W, C*W//2) matrix."""
    wp = w // 2
    pw = np.zeros((c * w, c * wp), np.float32)
    for cc in range(c):
        for j in range(wp):
            pw[cc * w + 2 * j, cc * wp + j] = 0.5
            pw[cc * w + 2 * j + 1, cc * wp + j] = 0.5
    return jnp.asarray(pw)


def _bias_row(b, ow):
    """(OC,) bias -> (1, OC*ow) row matching the (*, OC*OW) activation cols."""
    return jnp.asarray(np.repeat(np.asarray(b, np.float32), ow)[None, :])


# ---------------------------------------------------------------------------
# Parameter init (PyTorch default: U(-1/sqrt(fan_in), +1/sqrt(fan_in)))
# ---------------------------------------------------------------------------
C3_GROUPS = [
    [0, 1, 2], [1, 2, 3], [2, 3, 4], [3, 4, 5], [0, 4, 5], [0, 1, 5],
    [0, 1, 2, 3], [1, 2, 3, 4], [2, 3, 4, 5], [0, 3, 4, 5], [0, 1, 4, 5],
    [0, 1, 2, 5], [0, 1, 3, 4], [1, 2, 4, 5], [0, 2, 3, 5],
    [0, 1, 2, 3, 4, 5],
]


def _u(key, shape, fan_in):
    bound = 1.0 / math.sqrt(fan_in)
    return jax.random.uniform(key, shape, jnp.float32, -bound, bound)


def init_params(key):
    keys = jax.random.split(key, 8 + 2 * len(C3_GROUPS))
    p = {}
    # c1: Conv2d(1, 6, 5)
    p["w1"] = _u(keys[0], (6, 1, 5, 5), 1 * 25)
    p["b1"] = _u(keys[1], (6,), 1 * 25)
    # c3: 16 partially-connected convs -> one masked dense (16, 6, 5, 5) weight
    w3 = jnp.zeros((16, 6, 5, 5), jnp.float32)
    b3 = jnp.zeros((16,), jnp.float32)
    for i, g in enumerate(C3_GROUPS):
        fan_in = len(g) * 25
        wg = _u(keys[2 + 2 * i], (len(g), 5, 5), fan_in)
        bg = _u(keys[3 + 2 * i], (), fan_in)
        w3 = w3.at[i, jnp.array(g)].set(wg)
        b3 = b3.at[i].set(bg)
    p["w3"], p["b3"] = w3, b3
    # c5: Conv2d(16, 120, 5)
    p["w5"] = _u(keys[34], (120, 16, 5, 5), 16 * 25)
    p["b5"] = _u(keys[35], (120,), 16 * 25)
    # f6: Linear(120, 84)
    p["w6"] = _u(keys[36], (84, 120), 120)
    p["b6"] = _u(keys[37], (84,), 120)
    return p


_WEIGHT_NAMES = ("g1", "b1", "pw1", "g3", "b3", "pw2", "g5", "b5", "w6t", "b6")


def pack_params(p):
    """Pre-pack torch-layout params into kernel-ready constant matrices."""
    return {
        "g1": _pack_conv(p["w1"], 32),   # (160, 168)
        "b1": _bias_row(p["b1"], 28),    # (1, 168)
        "pw1": _pack_colpool(6, 28),     # (168, 84)
        "g3": _pack_conv(p["w3"], 14),   # (420, 160)
        "b3": _bias_row(p["b3"], 10),    # (1, 160)
        "pw2": _pack_colpool(16, 10),    # (160, 80)
        "g5": _pack_conv(p["w5"], 5),    # (400, 120)
        "b5": _bias_row(p["b5"], 1),     # (1, 120)
        "w6t": jnp.asarray(np.asarray(p["w6"], np.float32).T),          # (120, 84)
        "b6": jnp.asarray(np.asarray(p["b6"], np.float32))[None, :],    # (1, 84)
    }


# ---------------------------------------------------------------------------
# The fused Pallas kernel: whole LeNet5 forward for one block of B images
# ---------------------------------------------------------------------------
def _lenet5_kernel(x_ref,
                   g1_ref, b1_ref, pw1_ref,
                   g3_ref, b3_ref, pw2_ref,
                   g5_ref, b5_ref,
                   w6_ref, b6_ref,
                   o_ref):
    """Activation layout ("h-major"): 2-D (H*B, C*W), row = h*B + b,
    col = c*W + x.  Tap slices and pool row pairs are contiguous, 8-aligned
    sublane blocks in this layout, so no reshapes/strides are needed."""
    dot = functools.partial(jnp.dot, preferred_element_type=jnp.float32)
    B = o_ref.shape[1]                      # batch block size
    x = x_ref[0]                            # (32*B, 32)

    def conv_relu(a, h_out, g_ref, b_ref):
        # a: (h_in*B, C*W)  ->  relu(conv5x5(a) + bias): (h_out*B, OC*OW)
        taps = [a[ky * B:(ky + h_out) * B, :] for ky in range(5)]
        lhs = jnp.concatenate(taps, axis=-1)            # (h_out*B, 5*C*W)
        return jnp.maximum(dot(lhs, g_ref[...]) + b_ref[...], 0.0)

    def avg_pool(y, h_out, pw_ref):
        # y: (2*h_out*B, C*W)  ->  2x2/2 average pool: (h_out*B, C*(W//2))
        y = dot(y, pw_ref[...])                         # pool along width
        rows = [0.5 * (y[(2 * r) * B:(2 * r + 1) * B, :]
                       + y[(2 * r + 1) * B:(2 * r + 2) * B, :])
                for r in range(h_out)]                  # pool along height
        return jnp.concatenate(rows, axis=0)

    a = conv_relu(x, 28, g1_ref, b1_ref)        # C1: (28B, 6*28)
    a = avg_pool(a, 14, pw1_ref)                # S2: (14B, 6*14)
    a = conv_relu(a, 10, g3_ref, b3_ref)        # C3: (10B, 16*10)
    a = avg_pool(a, 5, pw2_ref)                 # S4: (5B, 16*5)
    a = conv_relu(a, 1, g5_ref, b5_ref)         # C5: (B, 120)
    y = dot(a, w6_ref[...]) + b6_ref[...]       # F6: (B, 84)
    o_ref[0] = jnp.tanh(y) * 1.7519


def lenet5_forward(packed, x, *, b_tile=32):
    """x: (B, 1, 32, 32) float32 NCHW -> (B, 84) float32."""
    batch = x.shape[0]
    # Shrink the batch tile for small batches; keep it sublane (8) aligned.
    b_tile = max(8, min(b_tile, ((batch + 7) // 8) * 8))
    assert b_tile % 8 == 0
    nb = -(-batch // b_tile)
    padded = nb * b_tile

    # Wrapper-side layout plumbing (cheap XLA): pad the batch and present each
    # block in the h-major (32*b_tile, 32) layout the kernel expects.
    x2 = x.reshape(batch, 32, 32).astype(jnp.float32)
    x2 = jnp.pad(x2, ((0, padded - batch), (0, 0), (0, 0)))
    xh = (x2.reshape(nb, b_tile, 32, 32)
            .transpose(0, 2, 1, 3)
            .reshape(nb, 32 * b_tile, 32))

    weights = [packed[n] for n in _WEIGHT_NAMES]

    def _const_spec(arr):
        # Full-array block + constant index map: each weight is DMA'd once and
        # stays resident in VMEM across all grid steps.
        return pl.BlockSpec(arr.shape, lambda i: (0, 0))

    out = pl.pallas_call(
        _lenet5_kernel,
        out_shape=jax.ShapeDtypeStruct((nb, b_tile, 84), jnp.float32),
        grid=(nb,),
        in_specs=([pl.BlockSpec((1, 32 * b_tile, 32), lambda i: (i, 0, 0))]
                  + [_const_spec(w) for w in weights]),
        out_specs=pl.BlockSpec((1, b_tile, 84), lambda i: (i, 0, 0)),
        compiler_params=pltpu.CompilerParams(
            dimension_semantics=("parallel",)),
    )(xh, *weights)
    return out.reshape(padded, 84)[:batch]


# ---------------------------------------------------------------------------
# Pure-JAX reference (mirrors the PyTorch module) for a correctness check
# ---------------------------------------------------------------------------
def _reference_forward(p, x):
    def conv(x, w, b):
        y = lax.conv_general_dilated(
            x, w, window_strides=(1, 1), padding="VALID",
            dimension_numbers=("NCHW", "OIHW", "NCHW"))
        return y + b[None, :, None, None]

    def pool(x):
        return 0.25 * (x[:, :, 0::2, 0::2] + x[:, :, 0::2, 1::2]
                       + x[:, :, 1::2, 0::2] + x[:, :, 1::2, 1::2])

    y = pool(jax.nn.relu(conv(x, p["w1"], p["b1"])))
    y = pool(jax.nn.relu(conv(y, p["w3"], p["b3"])))
    y = jax.nn.relu(conv(y, p["w5"], p["b5"])).reshape(x.shape[0], -1)
    return jnp.tanh(y @ p["w6"].T + p["b6"]) * 1.7519


if __name__ == "__main__":
    key = jax.random.PRNGKey(0)
    pkey, xkey = jax.random.split(key)
    params = init_params(pkey)
    packed = pack_params(params)          # one-time weight pre-packing

    # LeNet5 needs 32x32 single-channel inputs.  batch=20 with b_tile=8 gives
    # a 3-step grid and exercises the batch-padding path (20 -> 24).
    x = jax.random.normal(xkey, (20, 1, 32, 32), dtype=jnp.float32)

    fwd = jax.jit(lenet5_forward, static_argnames=("b_tile",))
    out = jax.block_until_ready(fwd(packed, x, b_tile=8))
    assert out.shape == (20, 84), out.shape
    assert bool(jnp.all(jnp.isfinite(out)))

    ref = jax.block_until_ready(_reference_forward(params, x))
    err = float(jnp.max(jnp.abs(out - ref)))
    # Both paths run f32 contractions at the TPU MXU's default (bf16-pass)
    # matmul precision with different accumulation orders, so ~1e-5 agreement
    # is not guaranteed; 2e-2 is tight enough that any packing / layout /
    # indexing bug (which produces O(1) errors) is caught.
    assert err < 2e-2, err

    print("KERNEL_OK")
</pallas_src>

<mosaic_0001>
module attributes {stable_mosaic.version = 11 : i64} {
  func.func @_lenet5_kernel(%arg0: i32, %arg1: memref<1x256x32xf32, #tpu.memory_space<vmem>>, %arg2: memref<160x168xf32, #tpu.memory_space<vmem>>, %arg3: memref<1x168xf32, #tpu.memory_space<vmem>>, %arg4: memref<168x84xf32, #tpu.memory_space<vmem>>, %arg5: memref<420x160xf32, #tpu.memory_space<vmem>>, %arg6: memref<1x160xf32, #tpu.memory_space<vmem>>, %arg7: memref<160x80xf32, #tpu.memory_space<vmem>>, %arg8: memref<400x120xf32, #tpu.memory_space<vmem>>, %arg9: memref<1x120xf32, #tpu.memory_space<vmem>>, %arg10: memref<120x84xf32, #tpu.memory_space<vmem>>, %arg11: memref<1x84xf32, #tpu.memory_space<vmem>>, %arg12: memref<1x8x84xf32, #tpu.memory_space<vmem>>) attributes {dimension_semantics = [#tpu.dimension_semantics<parallel>], iteration_bounds = array<i64: 3>, scalar_prefetch = 0 : i64, scratch_operands = 0 : i64, tpu.core_type = #tpu.core_type<tc>, window_params = [{transform_indices = @transform_0, window_bounds = array<i64: 1, 256, 32>}, {pipeline_mode = #tpu.pipeline_mode<synchronous>, transform_indices = @transform_1, window_bounds = array<i64: 160, 168>}, {pipeline_mode = #tpu.pipeline_mode<synchronous>, transform_indices = @transform_2, window_bounds = array<i64: 1, 168>}, {pipeline_mode = #tpu.pipeline_mode<synchronous>, transform_indices = @transform_3, window_bounds = array<i64: 168, 84>}, {pipeline_mode = #tpu.pipeline_mode<synchronous>, transform_indices = @transform_4, window_bounds = array<i64: 420, 160>}, {pipeline_mode = #tpu.pipeline_mode<synchronous>, transform_indices = @transform_5, window_bounds = array<i64: 1, 160>}, {pipeline_mode = #tpu.pipeline_mode<synchronous>, transform_indices = @transform_6, window_bounds = array<i64: 160, 80>}, {pipeline_mode = #tpu.pipeline_mode<synchronous>, transform_indices = @transform_7, window_bounds = array<i64: 400, 120>}, {pipeline_mode = #tpu.pipeline_mode<synchronous>, transform_indices = @transform_8, window_bounds = array<i64: 1, 120>}, {pipeline_mode = #tpu.pipeline_mode<synchronous>, transform_indices = @transform_9, window_bounds = array<i64: 120, 84>}, {pipeline_mode = #tpu.pipeline_mode<synchronous>, transform_indices = @transform_10, window_bounds = array<i64: 1, 84>}, {transform_indices = @transform_11, window_bounds = array<i64: 1, 8, 84>}]} {
    %c0 = arith.constant 0 : index
    %c0_0 = arith.constant 0 : index
    %c0_1 = arith.constant 0 : index
    %0 = vector.load %arg1[%c0, %c0_0, %c0_1] : memref<1x256x32xf32, #tpu.memory_space<vmem>>, vector<1x256x32xf32>
    %1 = vector.shape_cast %0 : vector<1x256x32xf32> to vector<256x32xf32>
    %2 = vector.extract_strided_slice %1 {offsets = [0, 0], sizes = [224, 32], strides = [1, 1]} : vector<256x32xf32> to vector<224x32xf32>
    %3 = vector.extract_strided_slice %1 {offsets = [8, 0], sizes = [224, 32], strides = [1, 1]} : vector<256x32xf32> to vector<224x32xf32>
    %4 = vector.extract_strided_slice %1 {offsets = [16, 0], sizes = [224, 32], strides = [1, 1]} : vector<256x32xf32> to vector<224x32xf32>
    %5 = vector.extract_strided_slice %1 {offsets = [24, 0], sizes = [224, 32], strides = [1, 1]} : vector<256x32xf32> to vector<224x32xf32>
    %6 = vector.extract_strided_slice %1 {offsets = [32, 0], sizes = [224, 32], strides = [1, 1]} : vector<256x32xf32> to vector<224x32xf32>
    %7 = tpu.concatenate %2, %3, %4, %5, %6 in 1 : vector<224x32xf32>, vector<224x32xf32>, vector<224x32xf32>, vector<224x32xf32>, vector<224x32xf32> -> vector<224x160xf32>
    %c0_2 = arith.constant 0 : index
    %c0_3 = arith.constant 0 : index
    %8 = vector.load %arg2[%c0_2, %c0_3] : memref<160x168xf32, #tpu.memory_space<vmem>>, vector<160x168xf32>
    %cst = arith.constant dense<0.000000e+00> : vector<224x168xf32>
    %9 = tpu.matmul %7, %8, %cst {dimension_numbers = #tpu.dot_dimension_numbers<[1], [0], [0], [1], [0, 0, 1, 1], [], []>} : vector<224x160xf32>, vector<160x168xf32>, vector<224x168xf32> -> vector<224x168xf32>
    %c0_4 = arith.constant 0 : index
    %c0_5 = arith.constant 0 : index
    %10 = vector.load %arg3[%c0_4, %c0_5] : memref<1x168xf32, #tpu.memory_space<vmem>>, vector<1x168xf32>
    %11 = vector.broadcast %10 : vector<1x168xf32> to vector<224x168xf32>
    %12 = arith.addf %9, %11 : vector<224x168xf32>
    %cst_6 = arith.constant 0.000000e+00 : f32
    %13 = vector.broadcast %cst_6 : f32 to vector<224x168xf32>
    %14 = arith.maximumf %12, %13 : vector<224x168xf32>
    %c0_7 = arith.constant 0 : index
    %c0_8 = arith.constant 0 : index
    %15 = vector.load %arg4[%c0_7, %c0_8] : memref<168x84xf32, #tpu.memory_space<vmem>>, vector<168x84xf32>
    %cst_9 = arith.constant dense<0.000000e+00> : vector<224x84xf32>
    %16 = tpu.matmul %14, %15, %cst_9 {dimension_numbers = #tpu.dot_dimension_numbers<[1], [0], [0], [1], [0, 0, 1, 1], [], []>} : vector<224x168xf32>, vector<168x84xf32>, vector<224x84xf32> -> vector<224x84xf32>
    %17 = vector.extract_strided_slice %16 {offsets = [0, 0], sizes = [8, 84], strides = [1, 1]} : vector<224x84xf32> to vector<8x84xf32>
    %18 = vector.extract_strided_slice %16 {offsets = [8, 0], sizes = [8, 84], strides = [1, 1]} : vector<224x84xf32> to vector<8x84xf32>
    %19 = arith.addf %17, %18 : vector<8x84xf32>
    %cst_10 = arith.constant 5.000000e-01 : f32
    %20 = vector.broadcast %cst_10 : f32 to vector<8x84xf32>
    %21 = arith.mulf %20, %19 : vector<8x84xf32>
    %22 = vector.extract_strided_slice %16 {offsets = [16, 0], sizes = [8, 84], strides = [1, 1]} : vector<224x84xf32> to vector<8x84xf32>
    %23 = vector.extract_strided_slice %16 {offsets = [24, 0], sizes = [8, 84], strides = [1, 1]} : vector<224x84xf32> to vector<8x84xf32>
    %24 = arith.addf %22, %23 : vector<8x84xf32>
    %cst_11 = arith.constant 5.000000e-01 : f32
    %25 = vector.broadcast %cst_11 : f32 to vector<8x84xf32>
    %26 = arith.mulf %25, %24 : vector<8x84xf32>
    %27 = vector.extract_strided_slice %16 {offsets = [32, 0], sizes = [8, 84], strides = [1, 1]} : vector<224x84xf32> to vector<8x84xf32>
    %28 = vector.extract_strided_slice %16 {offsets = [40, 0], sizes = [8, 84], strides = [1, 1]} : vector<224x84xf32> to vector<8x84xf32>
    %29 = arith.addf %27, %28 : vector<8x84xf32>
    %cst_12 = arith.constant 5.000000e-01 : f32
    %30 = vector.broadcast %cst_12 : f32 to vector<8x84xf32>
    %31 = arith.mulf %30, %29 : vector<8x84xf32>
    %32 = vector.extract_strided_slice %16 {offsets = [48, 0], sizes = [8, 84], strides = [1, 1]} : vector<224x84xf32> to vector<8x84xf32>
    %33 = vector.extract_strided_slice %16 {offsets = [56, 0], sizes = [8, 84], strides = [1, 1]} : vector<224x84xf32> to vector<8x84xf32>
    %34 = arith.addf %32, %33 : vector<8x84xf32>
    %cst_13 = arith.constant 5.000000e-01 : f32
    %35 = vector.broadcast %cst_13 : f32 to vector<8x84xf32>
    %36 = arith.mulf %35, %34 : vector<8x84xf32>
    %37 = vector.extract_strided_slice %16 {offsets = [64, 0], sizes = [8, 84], strides = [1, 1]} : vector<224x84xf32> to vector<8x84xf32>
    %38 = vector.extract_strided_slice %16 {offsets = [72, 0], sizes = [8, 84], strides = [1, 1]} : vector<224x84xf32> to vector<8x84xf32>
    %39 = arith.addf %37, %38 : vector<8x84xf32>
    %cst_14 = arith.constant 5.000000e-01 : f32
    %40 = vector.broadcast %cst_14 : f32 to vector<8x84xf32>
    %41 = arith.mulf %40, %39 : vector<8x84xf32>
    %42 = vector.extract_strided_slice %16 {offsets = [80, 0], sizes = [8, 84], strides = [1, 1]} : vector<224x84xf32> to vector<8x84xf32>
    %43 = vector.extract_strided_slice %16 {offsets = [88, 0], sizes = [8, 84], strides = [1, 1]} : vector<224x84xf32> to vector<8x84xf32>
    %44 = arith.addf %42, %43 : vector<8x84xf32>
    %cst_15 = arith.constant 5.000000e-01 : f32
    %45 = vector.broadcast %cst_15 : f32 to vector<8x84xf32>
    %46 = arith.mulf %45, %44 : vector<8x84xf32>
    %47 = vector.extract_strided_slice %16 {offsets = [96, 0], sizes = [8, 84], strides = [1, 1]} : vector<224x84xf32> to vector<8x84xf32>
    %48 = vector.extract_strided_slice %16 {offsets = [104, 0], sizes = [8, 84], strides = [1, 1]} : vector<224x84xf32> to vector<8x84xf32>
    %49 = arith.addf %47, %48 : vector<8x84xf32>
    %cst_16 = arith.constant 5.000000e-01 : f32
    %50 = vector.broadcast %cst_16 : f32 to vector<8x84xf32>
    %51 = arith.mulf %50, %49 : vector<8x84xf32>
    %52 = vector.extract_strided_slice %16 {offsets = [112, 0], sizes = [8, 84], strides = [1, 1]} : vector<224x84xf32> to vector<8x84xf32>
    %53 = vector.extract_strided_slice %16 {offsets = [120, 0], sizes = [8, 84], strides = [1, 1]} : vector<224x84xf32> to vector<8x84xf32>
    %54 = arith.addf %52, %53 : vector<8x84xf32>
    %cst_17 = arith.constant 5.000000e-01 : f32
    %55 = vector.broadcast %cst_17 : f32 to vector<8x84xf32>
    %56 = arith.mulf %55, %54 : vector<8x84xf32>
    %57 = vector.extract_strided_slice %16 {offsets = [128, 0], sizes = [8, 84], strides = [1, 1]} : vector<224x84xf32> to vector<8x84xf32>
    %58 = vector.extract_strided_slice %16 {offsets = [136, 0], sizes = [8, 84], strides = [1, 1]} : vector<224x84xf32> to vector<8x84xf32>
    %59 = arith.addf %57, %58 : vector<8x84xf32>
    %cst_18 = arith.constant 5.000000e-01 : f32
    %60 = vector.broadcast %cst_18 : f32 to vector<8x84xf32>
    %61 = arith.mulf %60, %59 : vector<8x84xf32>
    %62 = vector.extract_strided_slice %16 {offsets = [144, 0], sizes = [8, 84], strides = [1, 1]} : vector<224x84xf32> to vector<8x84xf32>
    %63 = vector.extract_strided_slice %16 {offsets = [152, 0], sizes = [8, 84], strides = [1, 1]} : vector<224x84xf32> to vector<8x84xf32>
    %64 = arith.addf %62, %63 : vector<8x84xf32>
    %cst_19 = arith.constant 5.000000e-01 : f32
    %65 = vector.broadcast %cst_19 : f32 to vector<8x84xf32>
    %66 = arith.mulf %65, %64 : vector<8x84xf32>
    %67 = vector.extract_strided_slice %16 {offsets = [160, 0], sizes = [8, 84], strides = [1, 1]} : vector<224x84xf32> to vector<8x84xf32>
    %68 = vector.extract_strided_slice %16 {offsets = [168, 0], sizes = [8, 84], strides = [1, 1]} : vector<224x84xf32> to vector<8x84xf32>
    %69 = arith.addf %67, %68 : vector<8x84xf32>
    %cst_20 = arith.constant 5.000000e-01 : f32
    %70 = vector.broadcast %cst_20 : f32 to vector<8x84xf32>
    %71 = arith.mulf %70, %69 : vector<8x84xf32>
    %72 = vector.extract_strided_slice %16 {offsets = [176, 0], sizes = [8, 84], strides = [1, 1]} : vector<224x84xf32> to vector<8x84xf32>
    %73 = vector.extract_strided_slice %16 {offsets = [184, 0], sizes = [8, 84], strides = [1, 1]} : vector<224x84xf32> to vector<8x84xf32>
    %74 = arith.addf %72, %73 : vector<8x84xf32>
    %cst_21 = arith.constant 5.000000e-01 : f32
    %75 = vector.broadcast %cst_21 : f32 to vector<8x84xf32>
    %76 = arith.mulf %75, %74 : vector<8x84xf32>
    %77 = vector.extract_strided_slice %16 {offsets = [192, 0], sizes = [8, 84], strides = [1, 1]} : vector<224x84xf32> to vector<8x84xf32>
    %78 = vector.extract_strided_slice %16 {offsets = [200, 0], sizes = [8, 84], strides = [1, 1]} : vector<224x84xf32> to vector<8x84xf32>
    %79 = arith.addf %77, %78 : vector<8x84xf32>
    %cst_22 = arith.constant 5.000000e-01 : f32
    %80 = vector.broadcast %cst_22 : f32 to vector<8x84xf32>
    %81 = arith.mulf %80, %79 : vector<8x84xf32>
    %82 = vector.extract_strided_slice %16 {offsets = [208, 0], sizes = [8, 84], strides = [1, 1]} : vector<224x84xf32> to vector<8x84xf32>
    %83 = vector.extract_strided_slice %16 {offsets = [216, 0], sizes = [8, 84], strides = [1, 1]} : vector<224x84xf32> to vector<8x84xf32>
    %84 = arith.addf %82, %83 : vector<8x84xf32>
    %cst_23 = arith.constant 5.000000e-01 : f32
    %85 = vector.broadcast %cst_23 : f32 to vector<8x84xf32>
    %86 = arith.mulf %85, %84 : vector<8x84xf32>
    %87 = tpu.concatenate %21, %26, %31, %36, %41, %46, %51, %56, %61, %66, %71, %76, %81, %86 in 0 : vector<8x84xf32>, vector<8x84xf32>, vector<8x84xf32>, vector<8x84xf32>, vector<8x84xf32>, vector<8x84xf32>, vector<8x84xf32>, vector<8x84xf32>, vector<8x84xf32>, vector<8x84xf32>, vector<8x84xf32>, vector<8x84xf32>, vector<8x84xf32>, vector<8x84xf32> -> vector<112x84xf32>
    %88 = vector.extract_strided_slice %87 {offsets = [0, 0], sizes = [80, 84], strides = [1, 1]} : vector<112x84xf32> to vector<80x84xf32>
    %89 = vector.extract_strided_slice %87 {offsets = [8, 0], sizes = [80, 84], strides = [1, 1]} : vector<112x84xf32> to vector<80x84xf32>
    %90 = vector.extract_strided_slice %87 {offsets = [16, 0], sizes = [80, 84], strides = [1, 1]} : vector<112x84xf32> to vector<80x84xf32>
    %91 = vector.extract_strided_slice %87 {offsets = [24, 0], sizes = [80, 84], strides = [1, 1]} : vector<112x84xf32> to vector<80x84xf32>
    %92 = vector.extract_strided_slice %87 {offsets = [32, 0], sizes = [80, 84], strides = [1, 1]} : vector<112x84xf32> to vector<80x84xf32>
    %93 = tpu.concatenate %88, %89, %90, %91, %92 in 1 : vector<80x84xf32>, vector<80x84xf32>, vector<80x84xf32>, vector<80x84xf32>, vector<80x84xf32> -> vector<80x420xf32>
    %c0_24 = arith.constant 0 : index
    %c0_25 = arith.constant 0 : index
    %94 = vector.load %arg5[%c0_24, %c0_25] : memref<420x160xf32, #tpu.memory_space<vmem>>, vector<420x160xf32>
    %cst_26 = arith.constant dense<0.000000e+00> : vector<80x160xf32>
    %95 = tpu.matmul %93, %94, %cst_26 {dimension_numbers = #tpu.dot_dimension_numbers<[1], [0], [0], [1], [0, 0, 1, 1], [], []>} : vector<80x420xf32>, vector<420x160xf32>, vector<80x160xf32> -> vector<80x160xf32>
    %c0_27 = arith.constant 0 : index
    %c0_28 = arith.constant 0 : index
    %96 = vector.load %arg6[%c0_27, %c0_28] : memref<1x160xf32, #tpu.memory_space<vmem>>, vector<1x160xf32>
    %97 = vector.broadcast %96 : vector<1x160xf32> to vector<80x160xf32>
    %98 = arith.addf %95, %97 : vector<80x160xf32>
    %cst_29 = arith.constant 0.000000e+00 : f32
    %99 = vector.broadcast %cst_29 : f32 to vector<80x160xf32>
    %100 = arith.maximumf %98, %99 : vector<80x160xf32>
    %c0_30 = arith.constant 0 : index
    %c0_31 = arith.constant 0 : index
    %101 = vector.load %arg7[%c0_30, %c0_31] : memref<160x80xf32, #tpu.memory_space<vmem>>, vector<160x80xf32>
    %cst_32 = arith.constant dense<0.000000e+00> : vector<80x80xf32>
    %102 = tpu.matmul %100, %101, %cst_32 {dimension_numbers = #tpu.dot_dimension_numbers<[1], [0], [0], [1], [0, 0, 1, 1], [], []>} : vector<80x160xf32>, vector<160x80xf32>, vector<80x80xf32> -> vector<80x80xf32>
    %103 = vector.extract_strided_slice %102 {offsets = [0, 0], sizes = [8, 80], strides = [1, 1]} : vector<80x80xf32> to vector<8x80xf32>
    %104 = vector.extract_strided_slice %102 {offsets = [8, 0], sizes = [8, 80], strides = [1, 1]} : vector<80x80xf32> to vector<8x80xf32>
    %105 = arith.addf %103, %104 : vector<8x80xf32>
    %cst_33 = arith.constant 5.000000e-01 : f32
    %106 = vector.broadcast %cst_33 : f32 to vector<8x80xf32>
    %107 = arith.mulf %106, %105 : vector<8x80xf32>
    %108 = vector.extract_strided_slice %102 {offsets = [16, 0], sizes = [8, 80], strides = [1, 1]} : vector<80x80xf32> to vector<8x80xf32>
    %109 = vector.extract_strided_slice %102 {offsets = [24, 0], sizes = [8, 80], strides = [1, 1]} : vector<80x80xf32> to vector<8x80xf32>
    %110 = arith.addf %108, %109 : vector<8x80xf32>
    %cst_34 = arith.constant 5.000000e-01 : f32
    %111 = vector.broadcast %cst_34 : f32 to vector<8x80xf32>
    %112 = arith.mulf %111, %110 : vector<8x80xf32>
    %113 = vector.extract_strided_slice %102 {offsets = [32, 0], sizes = [8, 80], strides = [1, 1]} : vector<80x80xf32> to vector<8x80xf32>
    %114 = vector.extract_strided_slice %102 {offsets = [40, 0], sizes = [8, 80], strides = [1, 1]} : vector<80x80xf32> to vector<8x80xf32>
    %115 = arith.addf %113, %114 : vector<8x80xf32>
    %cst_35 = arith.constant 5.000000e-01 : f32
    %116 = vector.broadcast %cst_35 : f32 to vector<8x80xf32>
    %117 = arith.mulf %116, %115 : vector<8x80xf32>
    %118 = vector.extract_strided_slice %102 {offsets = [48, 0], sizes = [8, 80], strides = [1, 1]} : vector<80x80xf32> to vector<8x80xf32>
    %119 = vector.extract_strided_slice %102 {offsets = [56, 0], sizes = [8, 80], strides = [1, 1]} : vector<80x80xf32> to vector<8x80xf32>
    %120 = arith.addf %118, %119 : vector<8x80xf32>
    %cst_36 = arith.constant 5.000000e-01 : f32
    %121 = vector.broadcast %cst_36 : f32 to vector<8x80xf32>
    %122 = arith.mulf %121, %120 : vector<8x80xf32>
    %123 = vector.extract_strided_slice %102 {offsets = [64, 0], sizes = [8, 80], strides = [1, 1]} : vector<80x80xf32> to vector<8x80xf32>
    %124 = vector.extract_strided_slice %102 {offsets = [72, 0], sizes = [8, 80], strides = [1, 1]} : vector<80x80xf32> to vector<8x80xf32>
    %125 = arith.addf %123, %124 : vector<8x80xf32>
    %cst_37 = arith.constant 5.000000e-01 : f32
    %126 = vector.broadcast %cst_37 : f32 to vector<8x80xf32>
    %127 = arith.mulf %126, %125 : vector<8x80xf32>
    %128 = tpu.concatenate %107, %112, %117, %122, %127 in 0 : vector<8x80xf32>, vector<8x80xf32>, vector<8x80xf32>, vector<8x80xf32>, vector<8x80xf32> -> vector<40x80xf32>
    %129 = vector.extract_strided_slice %128 {offsets = [0, 0], sizes = [8, 80], strides = [1, 1]} : vector<40x80xf32> to vector<8x80xf32>
    %130 = vector.extract_strided_slice %128 {offsets = [8, 0], sizes = [8, 80], strides = [1, 1]} : vector<40x80xf32> to vector<8x80xf32>
    %131 = vector.extract_strided_slice %128 {offsets = [16, 0], sizes = [8, 80], strides = [1, 1]} : vector<40x80xf32> to vector<8x80xf32>
    %132 = vector.extract_strided_slice %128 {offsets = [24, 0], sizes = [8, 80], strides = [1, 1]} : vector<40x80xf32> to vector<8x80xf32>
    %133 = vector.extract_strided_slice %128 {offsets = [32, 0], sizes = [8, 80], strides = [1, 1]} : vector<40x80xf32> to vector<8x80xf32>
    %134 = tpu.concatenate %129, %130, %131, %132, %133 in 1 : vector<8x80xf32>, vector<8x80xf32>, vector<8x80xf32>, vector<8x80xf32>, vector<8x80xf32> -> vector<8x400xf32>
    %c0_38 = arith.constant 0 : index
    %c0_39 = arith.constant 0 : index
    %135 = vector.load %arg8[%c0_38, %c0_39] : memref<400x120xf32, #tpu.memory_space<vmem>>, vector<400x120xf32>
    %cst_40 = arith.constant dense<0.000000e+00> : vector<8x120xf32>
    %136 = tpu.matmul %134, %135, %cst_40 {dimension_numbers = #tpu.dot_dimension_numbers<[1], [0], [0], [1], [0, 0, 1, 1], [], []>} : vector<8x400xf32>, vector<400x120xf32>, vector<8x120xf32> -> vector<8x120xf32>
    %c0_41 = arith.constant 0 : index
    %c0_42 = arith.constant 0 : index
    %137 = vector.load %arg9[%c0_41, %c0_42] : memref<1x120xf32, #tpu.memory_space<vmem>>, vector<1x120xf32>
    %138 = vector.broadcast %137 : vector<1x120xf32> to vector<8x120xf32>
    %139 = arith.addf %136, %138 : vector<8x120xf32>
    %cst_43 = arith.constant 0.000000e+00 : f32
    %140 = vector.broadcast %cst_43 : f32 to vector<8x120xf32>
    %141 = arith.maximumf %139, %140 : vector<8x120xf32>
    %c0_44 = arith.constant 0 : index
    %c0_45 = arith.constant 0 : index
    %142 = vector.load %arg10[%c0_44, %c0_45] : memref<120x84xf32, #tpu.memory_space<vmem>>, vector<120x84xf32>
    %cst_46 = arith.constant dense<0.000000e+00> : vector<8x84xf32>
    %143 = tpu.matmul %141, %142, %cst_46 {dimension_numbers = #tpu.dot_dimension_numbers<[1], [0], [0], [1], [0, 0, 1, 1], [], []>} : vector<8x120xf32>, vector<120x84xf32>, vector<8x84xf32> -> vector<8x84xf32>
    %c0_47 = arith.constant 0 : index
    %c0_48 = arith.constant 0 : index
    %144 = vector.load %arg11[%c0_47, %c0_48] : memref<1x84xf32, #tpu.memory_space<vmem>>, vector<1x84xf32>
    %145 = vector.broadcast %144 : vector<1x84xf32> to vector<8x84xf32>
    %146 = arith.addf %143, %145 : vector<8x84xf32>
    %147 = math.tanh %146 : vector<8x84xf32>
    %cst_49 = arith.constant 1.751900e+00 : f32
    %148 = vector.broadcast %cst_49 : f32 to vector<8x84xf32>
    %149 = arith.mulf %147, %148 : vector<8x84xf32>
    %c0_50 = arith.constant 0 : index
    %c0_51 = arith.constant 0 : index
    %c0_52 = arith.constant 0 : index
    %150 = vector.load %arg12[%c0_50, %c0_51, %c0_52] : memref<1x8x84xf32, #tpu.memory_space<vmem>>, vector<1x8x84xf32>
    %151 = vector.shape_cast %150 : vector<1x8x84xf32> to vector<8x84xf32>
    %152 = vector.shape_cast %149 : vector<8x84xf32> to vector<1x8x84xf32>
    tpu.vector_store %arg12[%c0_50, %c0_51, %c0_52], %152 {strides = array<i32>} : memref<1x8x84xf32, #tpu.memory_space<vmem>>, vector<1x8x84xf32>,
    return
  }
  func.func @transform_0(%arg0: i32) -> (i32, i32, i32) {
    %c0_i32 = arith.constant 0 : i32
    %c0_i32_0 = arith.constant 0 : i32
    %c0_i32_1 = arith.constant 0 : i32
    return %arg0, %c0_i32, %c0_i32_0 : i32, i32, i32
  }
  func.func @transform_1(%arg0: i32) -> (i32, i32) {
    %c0_i32 = arith.constant 0 : i32
    %c0_i32_0 = arith.constant 0 : i32
    %c0_i32_1 = arith.constant 0 : i32
    return %c0_i32, %c0_i32_0 : i32, i32
  }
  func.func @transform_2(%arg0: i32) -> (i32, i32) {
    %c0_i32 = arith.constant 0 : i32
    %c0_i32_0 = arith.constant 0 : i32
    %c0_i32_1 = arith.constant 0 : i32
    return %c0_i32, %c0_i32_0 : i32, i32
  }
  func.func @transform_3(%arg0: i32) -> (i32, i32) {
    %c0_i32 = arith.constant 0 : i32
    %c0_i32_0 = arith.constant 0 : i32
    %c0_i32_1 = arith.constant 0 : i32
    return %c0_i32, %c0_i32_0 : i32, i32
  }
  func.func @transform_4(%arg0: i32) -> (i32, i32) {
    %c0_i32 = arith.constant 0 : i32
    %c0_i32_0 = arith.constant 0 : i32
    %c0_i32_1 = arith.constant 0 : i32
    return %c0_i32, %c0_i32_0 : i32, i32
  }
  func.func @transform_5(%arg0: i32) -> (i32, i32) {
    %c0_i32 = arith.constant 0 : i32
    %c0_i32_0 = arith.constant 0 : i32
    %c0_i32_1 = arith.constant 0 : i32
    return %c0_i32, %c0_i32_0 : i32, i32
  }
  func.func @transform_6(%arg0: i32) -> (i32, i32) {
    %c0_i32 = arith.constant 0 : i32
    %c0_i32_0 = arith.constant 0 : i32
    %c0_i32_1 = arith.constant 0 : i32
    return %c0_i32, %c0_i32_0 : i32, i32
  }
  func.func @transform_7(%arg0: i32) -> (i32, i32) {
    %c0_i32 = arith.constant 0 : i32
    %c0_i32_0 = arith.constant 0 : i32
    %c0_i32_1 = arith.constant 0 : i32
    return %c0_i32, %c0_i32_0 : i32, i32
  }
  func.func @transform_8(%arg0: i32) -> (i32, i32) {
    %c0_i32 = arith.constant 0 : i32
    %c0_i32_0 = arith.constant 0 : i32
    %c0_i32_1 = arith.constant 0 : i32
    return %c0_i32, %c0_i32_0 : i32, i32
  }
  func.func @transform_9(%arg0: i32) -> (i32, i32) {
    %c0_i32 = arith.constant 0 : i32
    %c0_i32_0 = arith.constant 0 : i32
    %c0_i32_1 = arith.constant 0 : i32
    return %c0_i32, %c0_i32_0 : i32, i32
  }
  func.func @transform_10(%arg0: i32) -> (i32, i32) {
    %c0_i32 = arith.constant 0 : i32
    %c0_i32_0 = arith.constant 0 : i32
    %c0_i32_1 = arith.constant 0 : i32
    return %c0_i32, %c0_i32_0 : i32, i32
  }
  func.func @transform_11(%arg0: i32) -> (i32, i32, i32) {
    %c0_i32 = arith.constant 0 : i32
    %c0_i32_0 = arith.constant 0 : i32
    %c0_i32_1 = arith.constant 0 : i32
    return %arg0, %c0_i32, %c0_i32_0 : i32, i32, i32
  }
}

</mosaic_0001>

<llo_original>
// kernel: lenet5_forward.1
$region0: #{lenet5_forward.1}
  #allocation0 [shape = 'u32[]', space=smem, size = 0x4, offset = 0x4, fixed_abs, tag = 'smem constant byte address 0x4 - core index']
  #allocation1 [shape = 'u32[144,128]{1,0:T(1,128)}', space=vmem, size = 0x12000, scoped, tag = 'internal scratch']
  %s0 = inlined_call_operand.vmem [shape: f32[3,256,32], index: 0, kind: input, shape index: {}]
  %s1 = inlined_call_operand.vmem [shape: f32[160,168], index: 1, kind: input, shape index: {}]
  %s2 = inlined_call_operand.vmem [shape: f32[1,168], index: 2, kind: input, shape index: {}]
  %s3 = inlined_call_operand.vmem [shape: f32[168,84], index: 3, kind: input, shape index: {}]
  %s4 = inlined_call_operand.vmem [shape: f32[420,160], index: 4, kind: input, shape index: {}]
  %s5 = inlined_call_operand.vmem [shape: f32[1,160], index: 5, kind: input, shape index: {}]
  %s6 = inlined_call_operand.vmem [shape: f32[160,80], index: 6, kind: input, shape index: {}]
  %s7 = inlined_call_operand.vmem [shape: f32[400,120], index: 7, kind: input, shape index: {}]
  %s8 = inlined_call_operand.vmem [shape: f32[1,120], index: 8, kind: input, shape index: {}]
  %s9 = inlined_call_operand.vmem [shape: f32[120,84], index: 9, kind: input, shape index: {}]
  %s10 = inlined_call_operand.vmem [shape: f32[1,84], index: 10, kind: input, shape index: {}]
  %s11 = inlined_call_operand.hbm [shape: f32[3,8,84], index: 11, kind: output, shape index: {}]
  %s12 = sld [smem:[#allocation0]]
  $region77: #{lenet5_forward.1} parent=0
    _
  %s14 = ssub.s32 1, %s12
  %s15 = scalar_select 0, %s14, %s12
  $region1: #{lenet5_forward.1} parent=0
    #allocation2 [shape = 'u8[8192]{0}', space=vmem, size = 0x2000, scoped, tag = 'output window, operand 0']
    #allocation3 [shape = 's32[2]{0}', space=sflag, size = 0x8, scoped, tag = 'scoped memory for lenet5_forward.1']
    %16 = vsyncpa [#allocation3], 0
    %s17 = scalar_lea.sflag [#allocation3], 1
    %18 = vsyncpa %s17, 0
    loop: start=0, step=1, limit=5
    $region2: #{lenet5_forward.1} parent=1 // loop_pre_header
      _
    $region3: #{lenet5_forward.1} parent=1 // loop_header
      %s20 = sphi 0, %s24
      %p21 = scmp.ge.s32.totalorder %s20, 5
      %s30 = sphi 0, %s32
      %s33 = sphi 0, %s30
      %s34 = sphi 0, %s33
      %s50 = sphi 0, %s34
      %s54 = sphi 0, %s54
      %s56 = sphi 0, %s54
      %s57 = sphi 0, %s56
      %s71 = sphi 0, %s57
      %s75 = sphi 0, %s75
      %s77 = sphi 0, %s75
      %s78 = sphi 0, %s77
      %s92 = sphi 0, %s78
      %s96 = sphi 0, %s96
      %s98 = sphi 0, %s96
      %s99 = sphi 0, %s98
      %s113 = sphi 0, %s99
      %s117 = sphi 0, %s117
      %s119 = sphi 0, %s117
      %s120 = sphi 0, %s119
      %s134 = sphi 0, %s120
      %s138 = sphi 0, %s138
      %s140 = sphi 0, %s138
      %s141 = sphi 0, %s140
      %s155 = sphi 0, %s141
      %s159 = sphi 0, %s159
      %s161 = sphi 0, %s159
      %s162 = sphi 0, %s161
      %s176 = sphi 0, %s162
      %s180 = sphi 0, %s180
      %s182 = sphi 0, %s180
      %s183 = sphi 0, %s182
      %s197 = sphi 0, %s183
      %s201 = sphi 0, %s201
      %s203 = sphi 0, %s201
      %s204 = sphi 0, %s203
      %s218 = sphi 0, %s204
      %s222 = sphi 0, %s222
      %s224 = sphi 0, %s222
      %s225 = sphi 0, %s224
      %s239 = sphi 0, %s225
      %s243 = sphi 0, %s243
      %s245 = sphi 0, %s243
      %s246 = sphi 0, %s245
      %s260 = sphi 0, %s246
      %s266 = sphi 0, %s268
      %s269 = sphi 0, %s266
      %s270 = sphi 0, %s269
      %s286 = sphi 0, %s270
    $region4: #{lenet5_forward.1} parent=1 // loop_header_branch
      %23 = sbr.rel (%p21) target = $region8
    $region5: #{lenet5_forward.1} parent=1 // loop_body
      %s25 = ssub.s32 %s20, 1
      %s26 = ssub.s32 %s20, 2
      %s27 = sadd.s32 %s20, 1
      %s28 = ssub.s32 %s20, %s27
      %p29 = scmp.eq.s32.totalorder %s28, 0
      %s31 = sadd.s32 %s30, 1
      %s32 = scalar_select %p29, %s30, %s31
      %p35 = pneg %p29
      %p36 = scmp.eq.s32.totalorder %s20, 2
      %p37 = por %p35, %p36
      %p38 = scmp.ne.s32.totalorder %s30, %s33
      %p39 = scmp.eq.s32.totalorder %s20, 0
      %p40 = por %p38, %p39
      %p41 = scmp.ne.s32.totalorder %s30, %s33
      %p42 = scmp.eq.s32.totalorder %s25, 2
      %p43 = por %p41, %p42
      %p44 = scmp.ne.s32.totalorder %s33, %s34
      %p45 = scmp.eq.s32.totalorder %s25, 0
      %p46 = por %p44, %p45
      %p47 = scmp.ne.s32.totalorder %s33, %s34
      %p48 = scmp.eq.s32.totalorder %s26, 2
      %p49 = por %p47, %p48
      %p51 = scmp.ne.s32.totalorder %s34, %s50
      %p52 = scmp.eq.s32.totalorder %s26, 0
      %p53 = por %p51, %p52
      %s55 = sadd.s32 %s54, 1
      %p58 = scmp.eq.s32.totalorder %s20, 2
      %p59 = scmp.ne.s32.totalorder %s54, %s56
      %p60 = scmp.eq.s32.totalorder %s20, 0
      %p61 = por %p59, %p60
      %p62 = scmp.ne.s32.totalorder %s54, %s56
      %p63 = scmp.eq.s32.totalorder %s25, 2
      %p64 = por %p62, %p63
      %p65 = scmp.ne.s32.totalorder %s56, %s57
      %p66 = scmp.eq.s32.totalorder %s25, 0
      %p67 = por %p65, %p66
      %p68 = scmp.ne.s32.totalorder %s56, %s57
      %p69 = scmp.eq.s32.totalorder %s26, 2
      %p70 = por %p68, %p69
      %p72 = scmp.ne.s32.totalorder %s57, %s71
      %p73 = scmp.eq.s32.totalorder %s26, 0
      %p74 = por %p72, %p73
      %s76 = sadd.s32 %s75, 1
      %p79 = scmp.eq.s32.totalorder %s20, 2
      %p80 = scmp.ne.s32.totalorder %s75, %s77
      %p81 = scmp.eq.s32.totalorder %s20, 0
      %p82 = por %p80, %p81
      %p83 = scmp.ne.s32.totalorder %s75, %s77
      %p84 = scmp.eq.s32.totalorder %s25, 2
      %p85 = por %p83, %p84
      %p86 = scmp.ne.s32.totalorder %s77, %s78
      %p87 = scmp.eq.s32.totalorder %s25, 0
      %p88 = por %p86, %p87
      %p89 = scmp.ne.s32.totalorder %s77, %s78
      %p90 = scmp.eq.s32.totalorder %s26, 2
      %p91 = por %p89, %p90
      %p93 = scmp.ne.s32.totalorder %s78, %s92
      %p94 = scmp.eq.s32.totalorder %s26, 0
      %p95 = por %p93, %p94
      %s97 = sadd.s32 %s96, 1
      %p100 = scmp.eq.s32.totalorder %s20, 2
      %p101 = scmp.ne.s32.totalorder %s96, %s98
      %p102 = scmp.eq.s32.totalorder %s20, 0
      %p103 = por %p101, %p102
      %p104 = scmp.ne.s32.totalorder %s96, %s98
      %p105 = scmp.eq.s32.totalorder %s25, 2
      %p106 = por %p104, %p105
      %p107 = scmp.ne.s32.totalorder %s98, %s99
      %p108 = scmp.eq.s32.totalorder %s25, 0
      %p109 = por %p107, %p108
      %p110 = scmp.ne.s32.totalorder %s98, %s99
      %p111 = scmp.eq.s32.totalorder %s26, 2
      %p112 = por %p110, %p111
      %p114 = scmp.ne.s32.totalorder %s99, %s113
      %p115 = scmp.eq.s32.totalorder %s26, 0
      %p116 = por %p114, %p115
      %s118 = sadd.s32 %s117, 1
      %p121 = scmp.eq.s32.totalorder %s20, 2
      %p122 = scmp.ne.s32.totalorder %s117, %s119
      %p123 = scmp.eq.s32.totalorder %s20, 0
      %p124 = por %p122, %p123
      %p125 = scmp.ne.s32.totalorder %s117, %s119
      %p126 = scmp.eq.s32.totalorder %s25, 2
      %p127 = por %p125, %p126
      %p128 = scmp.ne.s32.totalorder %s119, %s120
      %p129 = scmp.eq.s32.totalorder %s25, 0
      %p130 = por %p128, %p129
      %p131 = scmp.ne.s32.totalorder %s119, %s120
      %p132 = scmp.eq.s32.totalorder %s26, 2
      %p133 = por %p131, %p132
      %p135 = scmp.ne.s32.totalorder %s120, %s134
      %p136 = scmp.eq.s32.totalorder %s26, 0
      %p137 = por %p135, %p136
      %s139 = sadd.s32 %s138, 1
      %p142 = scmp.eq.s32.totalorder %s20, 2
      %p143 = scmp.ne.s32.totalorder %s138, %s140
      %p144 = scmp.eq.s32.totalorder %s20, 0
      %p145 = por %p143, %p144
      %p146 = scmp.ne.s32.totalorder %s138, %s140
      %p147 = scmp.eq.s32.totalorder %s25, 2
      %p148 = por %p146, %p147
      %p149 = scmp.ne.s32.totalorder %s140, %s141
      %p150 = scmp.eq.s32.totalorder %s25, 0
      %p151 = por %p149, %p150
      %p152 = scmp.ne.s32.totalorder %s140, %s141
      %p153 = scmp.eq.s32.totalorder %s26, 2
      %p154 = por %p152, %p153
      %p156 = scmp.ne.s32.totalorder %s141, %s155
      %p157 = scmp.eq.s32.totalorder %s26, 0
      %p158 = por %p156, %p157
      %s160 = sadd.s32 %s159, 1
      %p163 = scmp.eq.s32.totalorder %s20, 2
      %p164 = scmp.ne.s32.totalorder %s159, %s161
      %p165 = scmp.eq.s32.totalorder %s20, 0
      %p166 = por %p164, %p165
      %p167 = scmp.ne.s32.totalorder %s159, %s161
      %p168 = scmp.eq.s32.totalorder %s25, 2
      %p169 = por %p167, %p168
      %p170 = scmp.ne.s32.totalorder %s161, %s162
      %p171 = scmp.eq.s32.totalorder %s25, 0
      %p172 = por %p170, %p171
      %p173 = scmp.ne.s32.totalorder %s161, %s162
      %p174 = scmp.eq.s32.totalorder %s26, 2
      %p175 = por %p173, %p174
      %p177 = scmp.ne.s32.totalorder %s162, %s176
      %p178 = scmp.eq.s32.totalorder %s26, 0
      %p179 = por %p177, %p178
      %s181 = sadd.s32 %s180, 1
      %p184 = scmp.eq.s32.totalorder %s20, 2
      %p185 = scmp.ne.s32.totalorder %s180, %s182
      %p186 = scmp.eq.s32.totalorder %s20, 0
      %p187 = por %p185, %p186
      %p188 = scmp.ne.s32.totalorder %s180, %s182
      %p189 = scmp.eq.s32.totalorder %s25, 2
      %p190 = por %p188, %p189
      %p191 = scmp.ne.s32.totalorder %s182, %s183
      %p192 = scmp.eq.s32.totalorder %s25, 0
      %p193 = por %p191, %p192
      %p194 = scmp.ne.s32.totalorder %s182, %s183
      %p195 = scmp.eq.s32.totalorder %s26, 2
      %p196 = por %p194, %p195
      %p198 = scmp.ne.s32.totalorder %s183, %s197
      %p199 = scmp.eq.s32.totalorder %s26, 0
      %p200 = por %p198, %p199
      %s202 = sadd.s32 %s201, 1
      %p205 = scmp.eq.s32.totalorder %s20, 2
      %p206 = scmp.ne.s32.totalorder %s201, %s203
      %p207 = scmp.eq.s32.totalorder %s20, 0
      %p208 = por %p206, %p207
      %p209 = scmp.ne.s32.totalorder %s201, %s203
      %p210 = scmp.eq.s32.totalorder %s25, 2
      %p211 = por %p209, %p210
      %p212 = scmp.ne.s32.totalorder %s203, %s204
      %p213 = scmp.eq.s32.totalorder %s25, 0
      %p214 = por %p212, %p213
      %p215 = scmp.ne.s32.totalorder %s203, %s204
      %p216 = scmp.eq.s32.totalorder %s26, 2
      %p217 = por %p215, %p216
      %p219 = scmp.ne.s32.totalorder %s204, %s218
      %p220 = scmp.eq.s32.totalorder %s26, 0
      %p221 = por %p219, %p220
      %s223 = sadd.s32 %s222, 1
      %p226 = scmp.eq.s32.totalorder %s20, 2
      %p227 = scmp.ne.s32.totalorder %s222, %s224
      %p228 = scmp.eq.s32.totalorder %s20, 0
      %p229 = por %p227, %p228
      %p230 = scmp.ne.s32.totalorder %s222, %s224
      %p231 = scmp.eq.s32.totalorder %s25, 2
      %p232 = por %p230, %p231
      %p233 = scmp.ne.s32.totalorder %s224, %s225
      %p234 = scmp.eq.s32.totalorder %s25, 0
      %p235 = por %p233, %p234
      %p236 = scmp.ne.s32.totalorder %s224, %s225
      %p237 = scmp.eq.s32.totalorder %s26, 2
      %p238 = por %p236, %p237
      %p240 = scmp.ne.s32.totalorder %s225, %s239
      %p241 = scmp.eq.s32.totalorder %s26, 0
      %p242 = por %p240, %p241
      %s244 = sadd.s32 %s243, 1
      %p247 = scmp.eq.s32.totalorder %s20, 2
      %p248 = scmp.ne.s32.totalorder %s243, %s245
      %p249 = scmp.eq.s32.totalorder %s20, 0
      %p250 = por %p248, %p249
      %p251 = scmp.ne.s32.totalorder %s243, %s245
      %p252 = scmp.eq.s32.totalorder %s25, 2
      %p253 = por %p251, %p252
      %p254 = scmp.ne.s32.totalorder %s245, %s246
      %p255 = scmp.eq.s32.totalorder %s25, 0
      %p256 = por %p254, %p255
      %p257 = scmp.ne.s32.totalorder %s245, %s246
      %p258 = scmp.eq.s32.totalorder %s26, 2
      %p259 = por %p257, %p258
      %p261 = scmp.ne.s32.totalorder %s246, %s260
      %p262 = scmp.eq.s32.totalorder %s26, 0
      %p263 = por %p261, %p262
      %s264 = ssub.s32 %s20, %s27
      %p265 = scmp.eq.s32.totalorder %s264, 0
      %s267 = sadd.s32 %s266, 1
      %s268 = scalar_select %p265, %s266, %s267
      %p271 = pneg %p265
      %p272 = scmp.eq.s32.totalorder %s20, 2
      %p273 = por %p271, %p272
      %p274 = scmp.ne.s32.totalorder %s266, %s269
      %p275 = scmp.eq.s32.totalorder %s20, 0
      %p276 = por %p274, %p275
      %p277 = scmp.ne.s32.totalorder %s266, %s269
      %p278 = scmp.eq.s32.totalorder %s25, 2
      %p279 = por %p277, %p278
      %p280 = scmp.ne.s32.totalorder %s269, %s270
      %p281 = scmp.eq.s32.totalorder %s25, 0
      %p282 = por %p280, %p281
      %p283 = scmp.ne.s32.totalorder %s269, %s270
      %p284 = scmp.eq.s32.totalorder %s26, 2
      %p285 = por %p283, %p284
      %p287 = scmp.ne.s32.totalorder %s270, %s286
      %p288 = scmp.eq.s32.totalorder %s26, 0
      %p289 = por %p287, %p288
      %p290 = scmp.le.s32.totalorder 1, %s20
      %p291 = scmp.lt.s32.totalorder %s20, 4
      %p292 = pnand %p290, %p291
      %p293 = pneg %p292
      // Predicated region
      $region9: #{lenet5_forward.1} parent=5 // pred_check
        _
      $region10: #{lenet5_forward.1} parent=5 // pred_check_branch
        %295 = sbr.rel (%p292) target = $region12
      $region11: #{lenet5_forward.1} parent=5 // pred_region
        %s296 = ssub.s32 %s20, 1
        // Predicated region
        $region13: #{lenet5_forward.1} parent=11 // pred_check
          %p297 = pneg %p67
        $region14: #{lenet5_forward.1} parent=11 // pred_check_branch
          %299 = sbr.rel (%p297) target = $region16
        $region15: #{lenet5_forward.1} parent=11 // pred_region
          _
        $region16: #{lenet5_forward.1} parent=11 // pred_fallthru
          _
        // Predicated region
        $region17: #{lenet5_forward.1} parent=11 // pred_check
          %p300 = pneg %p88
        $region18: #{lenet5_forward.1} parent=11 // pred_check_branch
          %302 = sbr.rel (%p300) target = $region20
        $region19: #{lenet5_forward.1} parent=11 // pred_region
          _
        $region20: #{lenet5_forward.1} parent=11 // pred_fallthru
          _
        // Predicated region
        $region21: #{lenet5_forward.1} parent=11 // pred_check
          %p303 = pneg %p109
        $region22: #{lenet5_forward.1} parent=11 // pred_check_branch
          %305 = sbr.rel (%p303) target = $region24
        $region23: #{lenet5_forward.1} parent=11 // pred_region
          _
        $region24: #{lenet5_forward.1} parent=11 // pred_fallthru
          _
        // Predicated region
        $region25: #{lenet5_forward.1} parent=11 // pred_check
          %p306 = pneg %p130
        $region26: #{lenet5_forward.1} parent=11 // pred_check_branch
          %308 = sbr.rel (%p306) target = $region28
        $region27: #{lenet5_forward.1} parent=11 // pred_region
          _
        $region28: #{lenet5_forward.1} parent=11 // pred_fallthru
          _
        // Predicated region
        $region29: #{lenet5_forward.1} parent=11 // pred_check
          %p309 = pneg %p151
        $region30: #{lenet5_forward.1} parent=11 // pred_check_branch
          %311 = sbr.rel (%p309) target = $region32
        $region31: #{lenet5_forward.1} parent=11 // pred_region
          _
        $region32: #{lenet5_forward.1} parent=11 // pred_fallthru
          _
        // Predicated region
        $region33: #{lenet5_forward.1} parent=11 // pred_check
          %p312 = pneg %p172
        $region34: #{lenet5_forward.1} parent=11 // pred_check_branch
          %314 = sbr.rel (%p312) target = $region36
        $region35: #{lenet5_forward.1} parent=11 // pred_region
          _
        $region36: #{lenet5_forward.1} parent=11 // pred_fallthru
          _
        // Predicated region
        $region37: #{lenet5_forward.1} parent=11 // pred_check
          %p315 = pneg %p193
        $region38: #{lenet5_forward.1} parent=11 // pred_check_branch
          %317 = sbr.rel (%p315) target = $region40
        $region39: #{lenet5_forward.1} parent=11 // pred_region
          _
        $region40: #{lenet5_forward.1} parent=11 // pred_fallthru
          _
        // Predicated region
        $region41: #{lenet5_forward.1} parent=11 // pred_check
          %p318 = pneg %p214
        $region42: #{lenet5_forward.1} parent=11 // pred_check_branch
          %320 = sbr.rel (%p318) target = $region44
        $region43: #{lenet5_forward.1} parent=11 // pred_region
          _
        $region44: #{lenet5_forward.1} parent=11 // pred_fallthru
          _
        // Predicated region
        $region45: #{lenet5_forward.1} parent=11 // pred_check
          %p321 = pneg %p235
        $region46: #{lenet5_forward.1} parent=11 // pred_check_branch
          %323 = sbr.rel (%p321) target = $region48
        $region47: #{lenet5_forward.1} parent=11 // pred_region
          _
        $region48: #{lenet5_forward.1} parent=11 // pred_fallthru
          _
        // Predicated region
        $region49: #{lenet5_forward.1} parent=11 // pred_check
          %p324 = pneg %p256
        $region50: #{lenet5_forward.1} parent=11 // pred_check_branch
          %326 = sbr.rel (%p324) target = $region52
        $region51: #{lenet5_forward.1} parent=11 // pred_region
          _
        $region52: #{lenet5_forward.1} parent=11 // pred_fallthru
          _
      $region12: #{lenet5_forward.1} parent=5 // pred_fallthru
        _
      %p327 = scmp.lt.s32.totalorder %s20, 3
      // Predicated region
      $region53: #{lenet5_forward.1} parent=5 // pred_check
        %p328 = pneg %p327
      $region54: #{lenet5_forward.1} parent=5 // pred_check_branch
        %330 = sbr.rel (%p328) target = $region56
      $region55: #{lenet5_forward.1} parent=5 // pred_region
        // Predicated region
        $region57: #{lenet5_forward.1} parent=55 // pred_check
          %p331 = pneg %p40
        $region58: #{lenet5_forward.1} parent=55 // pred_check_branch
          %333 = sbr.rel (%p331) target = $region60
        $region59: #{lenet5_forward.1} parent=55 // pred_region
          %p334 = scmp.lt.s32.totalorder %s20, 2
          %s335 = scalar_select %p334, %s20, 2
          %s336 = smul.addr %s335, 32
          %s337 = smul.addr %s336, 8
          %s338 = scalar_lea.vmem %s0, %s337
        $region60: #{lenet5_forward.1} parent=55 // pred_fallthru
          _
      $region56: #{lenet5_forward.1} parent=5 // pred_fallthru
        _
      %p339 = scmp.le.s32.totalorder 1, %s20
      %p340 = scmp.lt.s32.totalorder %s20, 4
      %p341 = pnand %p339, %p340
      %p342 = pneg %p341
      // Predicated region
      $region61: #{lenet5_forward.1} parent=5 // pred_check
        _
      $region62: #{lenet5_forward.1} parent=5 // pred_check_branch
        %344 = sbr.rel (%p341) target = $region64
      $region63: #{lenet5_forward.1} parent=5 // pred_region
        %s345 = ssub.s32 %s20, 1
        %p346 = scmp.lt.s32.totalorder %s25, 2
        %s347 = scalar_select %p346, %s25, 2
        %s348 = smul.addr %s347, 32
        %s349 = smul.addr %s348, 8
        %s350 = scalar_lea.vmem %s0, %s349
        %p351 = pneg %p46
        %p352 = pneg %p43
        %p353 = pneg %p67
        %p354 = pneg %p64
        %p355 = pneg %p88
        %p356 = pneg %p85
        %p357 = pneg %p109
        %p358 = pneg %p106
        %p359 = pneg %p130
        %p360 = pneg %p127
        %p361 = pneg %p151
        %p362 = pneg %p148
        %p363 = pneg %p172
        %p364 = pneg %p169
        %p365 = pneg %p193
        %p366 = pneg %p190
        %p367 = pneg %p214
        %p368 = pneg %p211
        %p369 = pneg %p235
        %p370 = pneg %p232
        %p371 = pneg %p256
        %p372 = pneg %p253
        %p373 = pneg %p282
        %p374 = pneg %p279
        %s375 = sand.u32 %s269, 1
        %s376 = scalar_lea.sflag [#allocation3], %s375
        %s377 = sand.u32 %s269, 1
        %s378 = smul.addr %s377, 8
        %s379 = scalar_lea.vmem [#allocation2], %s378
        %p380 = scmp.lt.s32.totalorder %s25, 2
        %s381 = scalar_select %p380, %s25, 2
        %s382 = smul.addr %s381, 32
        %s383 = smul.addr %s382, 8
        %s384 = scalar_lea.vmem %s0, %s383
        %v385 = vld [vmem:[%s384] sm:$0xff]
        %v386 = vld [vmem:[%s384 + $0x8] sm:$0xff]
        %v387 = vld [vmem:[%s384 + $0x10] sm:$0xff]
        %v388 = vld [vmem:[%s384 + $0x18] sm:$0xff]
        %v389 = vld [vmem:[%s384 + $0x20] sm:$0xff]
        %v390 = vld [vmem:[%s384 + $0x28] sm:$0xff]
        %v391 = vld [vmem:[%s384 + $0x30] sm:$0xff]
        %v392 = vld [vmem:[%s384 + $0x38] sm:$0xff]
        %v393 = vld [vmem:[%s384 + $0x40] sm:$0xff]
        %v394 = vld [vmem:[%s384 + $0x48] sm:$0xff]
        %v395 = vld [vmem:[%s384 + $0x50] sm:$0xff]
        %v396 = vld [vmem:[%s384 + $0x58] sm:$0xff]
        %v397 = vld [vmem:[%s384 + $0x60] sm:$0xff]
        %v398 = vld [vmem:[%s384 + $0x68] sm:$0xff]
        %v399 = vld [vmem:[%s384 + $0x70] sm:$0xff]
        %v400 = vld [vmem:[%s384 + $0x78] sm:$0xff]
        %v401 = vld [vmem:[%s384 + $0x80] sm:$0xff]
        %v402 = vld [vmem:[%s384 + $0x88] sm:$0xff]
        %v403 = vld [vmem:[%s384 + $0x90] sm:$0xff]
        %v404 = vld [vmem:[%s384 + $0x98] sm:$0xff]
        %v405 = vld [vmem:[%s384 + $0xa0] sm:$0xff]
        %v406 = vld [vmem:[%s384 + $0xa8] sm:$0xff]
        %v407 = vld [vmem:[%s384 + $0xb0] sm:$0xff]
        %v408 = vld [vmem:[%s384 + $0xb8] sm:$0xff]
        %v409 = vld [vmem:[%s384 + $0xc0] sm:$0xff]
        %v410 = vld [vmem:[%s384 + $0xc8] sm:$0xff]
        %v411 = vld [vmem:[%s384 + $0xd0] sm:$0xff]
        %v412 = vld [vmem:[%s384 + $0xd8] sm:$0xff]
        %v413 = vld [vmem:[%s384 + $0xe0] sm:$0xff]
        %v414 = vld [vmem:[%s384 + $0xe8] sm:$0xff]
        %v415 = vld [vmem:[%s384 + $0xf0] sm:$0xff]
        %v416 = vld [vmem:[%s384 + $0xf8] sm:$0xff]
        %445 = vrot.lane.b32.xlu0 %v386, 32
        %v446 = vpop.permute.xlu0 %445
        %447 = vrot.lane.b32.xlu0 %v387, 32
        %v448 = vpop.permute.xlu0 %447
        %449 = vrot.lane.b32.xlu0 %v388, 32
        %v450 = vpop.permute.xlu0 %449
        %451 = vrot.lane.b32.xlu0 %v389, 32
        %v452 = vpop.permute.xlu0 %451
        %453 = vrot.lane.b32.xlu0 %v390, 32
        %v454 = vpop.permute.xlu0 %453
        %455 = vrot.lane.b32.xlu0 %v391, 32
        %v456 = vpop.permute.xlu0 %455
        %457 = vrot.lane.b32.xlu0 %v392, 32
        %v458 = vpop.permute.xlu0 %457
        %459 = vrot.lane.b32.xlu0 %v393, 32
        %v460 = vpop.permute.xlu0 %459
        %461 = vrot.lane.b32.xlu0 %v394, 32
        %v462 = vpop.permute.xlu0 %461
        %463 = vrot.lane.b32.xlu0 %v395, 32
        %v464 = vpop.permute.xlu0 %463
        %465 = vrot.lane.b32.xlu0 %v396, 32
        %v466 = vpop.permute.xlu0 %465
        %467 = vrot.lane.b32.xlu0 %v397, 32
        %v468 = vpop.permute.xlu0 %467
        %469 = vrot.lane.b32.xlu0 %v398, 32
        %v470 = vpop.permute.xlu0 %469
        %471 = vrot.lane.b32.xlu0 %v399, 32
        %v472 = vpop.permute.xlu0 %471
        %473 = vrot.lane.b32.xlu0 %v400, 32
        %v474 = vpop.permute.xlu0 %473
        %475 = vrot.lane.b32.xlu0 %v401, 32
        %v476 = vpop.permute.xlu0 %475
        %477 = vrot.lane.b32.xlu0 %v402, 32
        %v478 = vpop.permute.xlu0 %477
        %479 = vrot.lane.b32.xlu0 %v403, 32
        %v480 = vpop.permute.xlu0 %479
        %481 = vrot.lane.b32.xlu0 %v404, 32
        %v482 = vpop.permute.xlu0 %481
        %483 = vrot.lane.b32.xlu0 %v405, 32
        %v484 = vpop.permute.xlu0 %483
        %485 = vrot.lane.b32.xlu0 %v406, 32
        %v486 = vpop.permute.xlu0 %485
        %487 = vrot.lane.b32.xlu0 %v407, 32
        %v488 = vpop.permute.xlu0 %487
        %489 = vrot.lane.b32.xlu0 %v408, 32
        %v490 = vpop.permute.xlu0 %489
        %491 = vrot.lane.b32.xlu0 %v409, 32
        %v492 = vpop.permute.xlu0 %491
        %493 = vrot.lane.b32.xlu0 %v410, 32
        %v494 = vpop.permute.xlu0 %493
        %495 = vrot.lane.b32.xlu0 %v411, 32
        %v496 = vpop.permute.xlu0 %495
        %497 = vrot.lane.b32.xlu0 %v412, 32
        %v498 = vpop.permute.xlu0 %497
        %499 = vrot.lane.b32.xlu0 %v413, 32
        %v500 = vpop.permute.xlu0 %499
        %530 = vrot.lane.b32.xlu0 %v387, 64
        %v531 = vpop.permute.xlu0 %530
        %532 = vrot.lane.b32.xlu0 %v388, 64
        %v533 = vpop.permute.xlu0 %532
        %534 = vrot.lane.b32.xlu0 %v389, 64
        %v535 = vpop.permute.xlu0 %534
        %536 = vrot.lane.b32.xlu0 %v390, 64
        %v537 = vpop.permute.xlu0 %536
        %538 = vrot.lane.b32.xlu0 %v391, 64
        %v539 = vpop.permute.xlu0 %538
        %540 = vrot.lane.b32.xlu0 %v392, 64
        %v541 = vpop.permute.xlu0 %540
        %542 = vrot.lane.b32.xlu0 %v393, 64
        %v543 = vpop.permute.xlu0 %542
        %544 = vrot.lane.b32.xlu0 %v394, 64
        %v545 = vpop.permute.xlu0 %544
        %546 = vrot.lane.b32.xlu0 %v395, 64
        %v547 = vpop.permute.xlu0 %546
        %548 = vrot.lane.b32.xlu0 %v396, 64
        %v549 = vpop.permute.xlu0 %548
        %550 = vrot.lane.b32.xlu0 %v397, 64
        %v551 = vpop.permute.xlu0 %550
        %552 = vrot.lane.b32.xlu0 %v398, 64
        %v553 = vpop.permute.xlu0 %552
        %554 = vrot.lane.b32.xlu0 %v399, 64
        %v555 = vpop.permute.xlu0 %554
        %556 = vrot.lane.b32.xlu0 %v400, 64
        %v557 = vpop.permute.xlu0 %556
        %558 = vrot.lane.b32.xlu0 %v401, 64
        %v559 = vpop.permute.xlu0 %558
        %560 = vrot.lane.b32.xlu0 %v402, 64
        %v561 = vpop.permute.xlu0 %560
        %562 = vrot.lane.b32.xlu0 %v403, 64
        %v563 = vpop.permute.xlu0 %562
        %564 = vrot.lane.b32.xlu0 %v404, 64
        %v565 = vpop.permute.xlu0 %564
        %566 = vrot.lane.b32.xlu0 %v405, 64
        %v567 = vpop.permute.xlu0 %566
        %568 = vrot.lane.b32.xlu0 %v406, 64
        %v569 = vpop.permute.xlu0 %568
        %570 = vrot.lane.b32.xlu0 %v407, 64
        %v571 = vpop.permute.xlu0 %570
        %572 = vrot.lane.b32.xlu0 %v408, 64
        %v573 = vpop.permute.xlu0 %572
        %574 = vrot.lane.b32.xlu0 %v409, 64
        %v575 = vpop.permute.xlu0 %574
        %576 = vrot.lane.b32.xlu0 %v410, 64
        %v577 = vpop.permute.xlu0 %576
        %578 = vrot.lane.b32.xlu0 %v411, 64
        %v579 = vpop.permute.xlu0 %578
        %580 = vrot.lane.b32.xlu0 %v412, 64
        %v581 = vpop.permute.xlu0 %580
        %582 = vrot.lane.b32.xlu0 %v413, 64
        %v583 = vpop.permute.xlu0 %582
        %584 = vrot.lane.b32.xlu0 %v414, 64
        %v585 = vpop.permute.xlu0 %584
        %615 = vrot.lane.b32.xlu0 %v388, 96
        %v616 = vpop.permute.xlu0 %615
        %617 = vrot.lane.b32.xlu0 %v389, 96
        %v618 = vpop.permute.xlu0 %617
        %619 = vrot.lane.b32.xlu0 %v390, 96
        %v620 = vpop.permute.xlu0 %619
        %621 = vrot.lane.b32.xlu0 %v391, 96
        %v622 = vpop.permute.xlu0 %621
        %623 = vrot.lane.b32.xlu0 %v392, 96
        %v624 = vpop.permute.xlu0 %623
        %625 = vrot.lane.b32.xlu0 %v393, 96
        %v626 = vpop.permute.xlu0 %625
        %627 = vrot.lane.b32.xlu0 %v394, 96
        %v628 = vpop.permute.xlu0 %627
        %629 = vrot.lane.b32.xlu0 %v395, 96
        %v630 = vpop.permute.xlu0 %629
        %631 = vrot.lane.b32.xlu0 %v396, 96
        %v632 = vpop.permute.xlu0 %631
        %633 = vrot.lane.b32.xlu0 %v397, 96
        %v634 = vpop.permute.xlu0 %633
        %635 = vrot.lane.b32.xlu0 %v398, 96
        %v636 = vpop.permute.xlu0 %635
        %637 = vrot.lane.b32.xlu0 %v399, 96
        %v638 = vpop.permute.xlu0 %637
        %639 = vrot.lane.b32.xlu0 %v400, 96
        %v640 = vpop.permute.xlu0 %639
        %641 = vrot.lane.b32.xlu0 %v401, 96
        %v642 = vpop.permute.xlu0 %641
        %643 = vrot.lane.b32.xlu0 %v402, 96
        %v644 = vpop.permute.xlu0 %643
        %645 = vrot.lane.b32.xlu0 %v403, 96
        %v646 = vpop.permute.xlu0 %645
        %647 = vrot.lane.b32.xlu0 %v404, 96
        %v648 = vpop.permute.xlu0 %647
        %649 = vrot.lane.b32.xlu0 %v405, 96
        %v650 = vpop.permute.xlu0 %649
        %651 = vrot.lane.b32.xlu0 %v406, 96
        %v652 = vpop.permute.xlu0 %651
        %653 = vrot.lane.b32.xlu0 %v407, 96
        %v654 = vpop.permute.xlu0 %653
        %655 = vrot.lane.b32.xlu0 %v408, 96
        %v656 = vpop.permute.xlu0 %655
        %657 = vrot.lane.b32.xlu0 %v409, 96
        %v658 = vpop.permute.xlu0 %657
        %659 = vrot.lane.b32.xlu0 %v410, 96
        %v660 = vpop.permute.xlu0 %659
        %661 = vrot.lane.b32.xlu0 %v411, 96
        %v662 = vpop.permute.xlu0 %661
        %663 = vrot.lane.b32.xlu0 %v412, 96
        %v664 = vpop.permute.xlu0 %663
        %665 = vrot.lane.b32.xlu0 %v413, 96
        %v666 = vpop.permute.xlu0 %665
        %667 = vrot.lane.b32.xlu0 %v414, 96
        %v668 = vpop.permute.xlu0 %667
        %669 = vrot.lane.b32.xlu0 %v415, 96
        %v670 = vpop.permute.xlu0 %669
        %vm699 = vcmask 261120
        %v700 = vsel %vm699, %v385, %v446
        %v701 = vsel %vm699, %v386, %v448
        %v702 = vsel %vm699, %v387, %v450
        %v703 = vsel %vm699, %v388, %v452
        %v704 = vsel %vm699, %v389, %v454
        %v705 = vsel %vm699, %v390, %v456
        %v706 = vsel %vm699, %v391, %v458
        %v707 = vsel %vm699, %v392, %v460
        %v708 = vsel %vm699, %v393, %v462
        %v709 = vsel %vm699, %v394, %v464
        %v710 = vsel %vm699, %v395, %v466
        %v711 = vsel %vm699, %v396, %v468
        %v712 = vsel %vm699, %v397, %v470
        %v713 = vsel %vm699, %v398, %v472
        %v714 = vsel %vm699, %v399, %v474
        %v715 = vsel %vm699, %v400, %v476
        %v716 = vsel %vm699, %v401, %v478
        %v717 = vsel %vm699, %v402, %v480
        %v718 = vsel %vm699, %v403, %v482
        %v719 = vsel %vm699, %v404, %v484
        %v720 = vsel %vm699, %v405, %v486
        %v721 = vsel %vm699, %v406, %v488
        %v722 = vsel %vm699, %v407, %v490
        %v723 = vsel %vm699, %v408, %v492
        %v724 = vsel %vm699, %v409, %v494
        %v725 = vsel %vm699, %v410, %v496
        %v726 = vsel %vm699, %v411, %v498
        %v727 = vsel %vm699, %v412, %v500
        %vm728 = vcmask 523264
        %v729 = vsel %vm728, %v700, %v531
        %v730 = vsel %vm728, %v701, %v533
        %v731 = vsel %vm728, %v702, %v535
        %v732 = vsel %vm728, %v703, %v537
        %v733 = vsel %vm728, %v704, %v539
        %v734 = vsel %vm728, %v705, %v541
        %v735 = vsel %vm728, %v706, %v543
        %v736 = vsel %vm728, %v707, %v545
        %v737 = vsel %vm728, %v708, %v547
        %v738 = vsel %vm728, %v709, %v549
        %v739 = vsel %vm728, %v710, %v551
        %v740 = vsel %vm728, %v711, %v553
        %v741 = vsel %vm728, %v712, %v555
        %v742 = vsel %vm728, %v713, %v557
        %v743 = vsel %vm728, %v714, %v559
        %v744 = vsel %vm728, %v715, %v561
        %v745 = vsel %vm728, %v716, %v563
        %v746 = vsel %vm728, %v717, %v565
        %v747 = vsel %vm728, %v718, %v567
        %v748 = vsel %vm728, %v719, %v569
        %v749 = vsel %vm728, %v720, %v571
        %v750 = vsel %vm728, %v721, %v573
        %v751 = vsel %vm728, %v722, %v575
        %v752 = vsel %vm728, %v723, %v577
        %v753 = vsel %vm728, %v724, %v579
        %v754 = vsel %vm728, %v725, %v581
        %v755 = vsel %vm728, %v726, %v583
        %v756 = vsel %vm728, %v727, %v585
        %vm757 = vcmask 785408
        %v758 = vsel %vm757, %v729, %v616
        %v759 = vsel %vm757, %v730, %v618
        %v760 = vsel %vm757, %v731, %v620
        %v761 = vsel %vm757, %v732, %v622
        %v762 = vsel %vm757, %v733, %v624
        %v763 = vsel %vm757, %v734, %v626
        %v764 = vsel %vm757, %v735, %v628
        %v765 = vsel %vm757, %v736, %v630
        %v766 = vsel %vm757, %v737, %v632
        %v767 = vsel %vm757, %v738, %v634
        %v768 = vsel %vm757, %v739, %v636
        %v769 = vsel %vm757, %v740, %v638
        %v770 = vsel %vm757, %v741, %v640
        %v771 = vsel %vm757, %v742, %v642
        %v772 = vsel %vm757, %v743, %v644
        %v773 = vsel %vm757, %v744, %v646
        %v774 = vsel %vm757, %v745, %v648
        %v775 = vsel %vm757, %v746, %v650
        %v776 = vsel %vm757, %v747, %v652
        %v777 = vsel %vm757, %v748, %v654
        %v778 = vsel %vm757, %v749, %v656
        %v779 = vsel %vm757, %v750, %v658
        %v780 = vsel %vm757, %v751, %v660
        %v781 = vsel %vm757, %v752, %v662
        %v782 = vsel %vm757, %v753, %v664
        %v783 = vsel %vm757, %v754, %v666
        %v784 = vsel %vm757, %v755, %v668
        %v785 = vsel %vm757, %v756, %v670
        %v786 = vld [vmem:[%s1] sm:$0xff]
        %v787 = vld [vmem:[%s1 + $0x8] sm:$0xff]
        %v788 = vld [vmem:[%s1 + $0x10] sm:$0xff]
        %v789 = vld [vmem:[%s1 + $0x18] sm:$0xff]
        %v790 = vld [vmem:[%s1 + $0x20] sm:$0xff]
        %v791 = vld [vmem:[%s1 + $0x28] sm:$0xff]
        %v792 = vld [vmem:[%s1 + $0x30] sm:$0xff]
        %v793 = vld [vmem:[%s1 + $0x38] sm:$0xff]
        %v794 = vld [vmem:[%s1 + $0x40] sm:$0xff]
        %v795 = vld [vmem:[%s1 + $0x48] sm:$0xff]
        %v796 = vld [vmem:[%s1 + $0x50] sm:$0xff]
        %v797 = vld [vmem:[%s1 + $0x58] sm:$0xff]
        %v798 = vld [vmem:[%s1 + $0x60] sm:$0xff]
        %v799 = vld [vmem:[%s1 + $0x68] sm:$0xff]
        %v800 = vld [vmem:[%s1 + $0x70] sm:$0xff]
        %v801 = vld [vmem:[%s1 + $0x78] sm:$0xff]
        %v802 = vld [vmem:[%s1 + $0x80] sm:$0xff]
        %v803 = vld [vmem:[%s1 + $0x88] sm:$0xff]
        %v804 = vld [vmem:[%s1 + $0x90] sm:$0xff]
        %v805 = vld [vmem:[%s1 + $0x98] sm:$0xff]
        %v806 = vld [vmem:[%s1 + $0xa0] sm:$0xff]
        %v807 = vld [vmem:[%s1 + $0xa8] sm:$0xff]
        %v808 = vld [vmem:[%s1 + $0xb0] sm:$0xff]
        %v809 = vld [vmem:[%s1 + $0xb8] sm:$0xff]
        %v810 = vld [vmem:[%s1 + $0xc0] sm:$0xff]
        %v811 = vld [vmem:[%s1 + $0xc8] sm:$0xff]
        %v812 = vld [vmem:[%s1 + $0xd0] sm:$0xff]
        %v813 = vld [vmem:[%s1 + $0xd8] sm:$0xff]
        %v814 = vld [vmem:[%s1 + $0xe0] sm:$0xff]
        %v815 = vld [vmem:[%s1 + $0xe8] sm:$0xff]
        %v816 = vld [vmem:[%s1 + $0xf0] sm:$0xff]
        %v817 = vld [vmem:[%s1 + $0xf8] sm:$0xff]
        %v818 = vld [vmem:[%s1 + $0x100] sm:$0xff]
        %v819 = vld [vmem:[%s1 + $0x108] sm:$0xff]
        %v820 = vld [vmem:[%s1 + $0x110] sm:$0xff]
        %v821 = vld [vmem:[%s1 + $0x118] sm:$0xff]
        %v822 = vld [vmem:[%s1 + $0x120] sm:$0xff]
        %v823 = vld [vmem:[%s1 + $0x128] sm:$0xff]
        %v824 = vld [vmem:[%s1 + $0x130] sm:$0xff]
        %v825 = vld [vmem:[%s1 + $0x138] sm:$0xff]
        %v826 = vld [vmem:[%s2] sm:$0x3]
        %v828 = vlaneseq
        %v829 = vshrl.u32 %v828, 7
        %v830 = vsub.s32 0, %v829
        %v831 = vrot.slane %v826, %v830
        %v832 = vlaneseq
        %v833 = vshrl.u32 %v832, 7
        %v834 = vsub.s32 1, %v833
        %v835 = vrot.slane %v826, %v834
        %v838 = vsel %vm699, %v389, 0
        %v840 = vsel %vm699, %v390, 0
        %v842 = vsel %vm699, %v391, 0
        %v844 = vsel %vm699, %v392, 0
        %v846 = vsel %vm699, %v393, 0
        %v848 = vsel %vm699, %v394, 0
        %v850 = vsel %vm699, %v395, 0
        %v852 = vsel %vm699, %v396, 0
        %v854 = vsel %vm699, %v397, 0
        %v856 = vsel %vm699, %v398, 0
        %v858 = vsel %vm699, %v399, 0
        %v860 = vsel %vm699, %v400, 0
        %v862 = vsel %vm699, %v401, 0
        %v864 = vsel %vm699, %v402, 0
        %v866 = vsel %vm699, %v403, 0
        %v868 = vsel %vm699, %v404, 0
        %v870 = vsel %vm699, %v405, 0
        %v872 = vsel %vm699, %v406, 0
        %v874 = vsel %vm699, %v407, 0
        %v876 = vsel %vm699, %v408, 0
        %v878 = vsel %vm699, %v409, 0
        %v880 = vsel %vm699, %v410, 0
        %v882 = vsel %vm699, %v411, 0
        %v884 = vsel %vm699, %v412, 0
        %v886 = vsel %vm699, %v413, 0
        %v888 = vsel %vm699, %v414, 0
        %v890 = vsel %vm699, %v415, 0
        %v893 = vsel %vm699, %v416, 0
        %895 = vmatprep.subr.mxu0 %v817
        %896 = vmatpush1.msra.mxu0 %v816
        %897 = vmatprep.subr.mxu0 %v815
        %898 = vmatpush1.msra.mxu0 %v814
        %899 = vmatprep.subr.mxu0 %v813
        %900 = vmatpush1.msra.mxu0 %v812
        %901 = vmatprep.subr.mxu0 %v811
        %902 = vmatpush1.msra.mxu0 %v810
        %903 = vmatprep.subr.mxu0 %v809
        %904 = vmatpush1.msra.mxu0 %v808
        %905 = vmatprep.subr.mxu0 %v807
        %906 = vmatpush1.msra.mxu0 %v806
        %907 = vmatprep.subr.mxu0 %v805
        %908 = vmatpush1.msra.mxu0 %v804
        %909 = vmatprep.subr.mxu0 %v803
        %910 = vmatpush1.msra.mxu0 %v802
        %911 = vmatprep.subr.mxu0 %v801
        %912 = vmatpush1.msra.mxu0 %v800
        %913 = vmatprep.subr.mxu0 %v799
        %914 = vmatpush1.msra.mxu0 %v798
        %915 = vmatprep.subr.mxu0 %v797
        %916 = vmatpush1.msra.mxu0 %v796
        %917 = vmatprep.subr.mxu0 %v795
        %918 = vmatpush1.msra.mxu0 %v794
        %919 = vmatprep.subr.mxu0 %v793
        %920 = vmatpush1.msra.mxu0 %v792
        %921 = vmatprep.subr.mxu0 %v791
        %922 = vmatpush1.msra.mxu0 %v790
        %923 = vmatprep.subr.mxu0 %v789
        %924 = vmatpush1.msra.mxu0 %v788
        %925 = vmatprep.subr.mxu0 %v787
        %926 = vmatpush1.msra.mxu0 %v786
        %927 = vmatprep.subr.mxu0 0.0
        %928 = vmatpush2.msra.mxu0 0.0
        %929 = vmatprep.subr.mxu0 0.0
        %930 = vmatpush2.msra.mxu0 0.0
        %931 = vmatprep.subr.mxu0 0.0
        %932 = vmatpush2.msra.mxu0 0.0
        %933 = vmatprep.subr.mxu0 0.0
        %934 = vmatpush2.msra.mxu0 0.0
        %935 = vmatprep.subr.mxu0 0.0
        %936 = vmatpush2.msra.mxu0 0.0
        %937 = vmatprep.subr.mxu0 0.0
        %938 = vmatpush2.msra.mxu0 0.0
        %939 = vmatprep.subr.mxu0 0.0
        %940 = vmatpush2.msra.mxu0 0.0
        %941 = vmatprep.subr.mxu0 0.0
        %942 = vmatpush2.msra.mxu0 0.0
        %943 = vmatprep.subr.mxu0 0.0
        %944 = vmatpush2.msra.mxu0 0.0
        %945 = vmatprep.subr.mxu0 0.0
        %946 = vmatpush2.msra.mxu0 0.0
        %947 = vmatprep.subr.mxu0 0.0
        %948 = vmatpush2.msra.mxu0 0.0
        %949 = vmatprep.subr.mxu0 0.0
        %950 = vmatpush2.msra.mxu0 0.0
        %951 = vmatprep.subr.mxu0 %v825
        %952 = vmatpush2.msra.mxu0 %v824
        %953 = vmatprep.subr.mxu0 %v823
        %954 = vmatpush2.msra.mxu0 %v822
        %955 = vmatprep.subr.mxu0 %v821
        %956 = vmatpush2.msra.mxu0 %v820
        %957 = vmatprep.subr.mxu0 %v819
        %958 = vmatpush2.msra.mxu0 %v818
        %959 = vmatprep.mubr.f32.mxu0 %v838
        %960 = vmatmul.mubr.f32.gmra.mxu0 %v758
        %v961 = vpop.f32.mrf.mxu0
        %v962 = vadd.f32 %v831, %v961
        %v963 = vpop.f32.mrf.mxu0
        %v964 = vadd.f32 %v835, %v963
        %965 = vmatprep.mubr.f32.mxu0 %v840
        %966 = vmatmul.mubr.f32.gmra.mxu0 %v759
        %v967 = vpop.f32.mrf.mxu0
        %v968 = vadd.f32 %v831, %v967
        %v969 = vpop.f32.mrf.mxu0
        %v970 = vadd.f32 %v835, %v969
        %971 = vmatprep.mubr.f32.mxu0 %v842
        %972 = vmatmul.mubr.f32.gmra.mxu0 %v760
        %v973 = vpop.f32.mrf.mxu0
        %v974 = vadd.f32 %v831, %v973
        %v975 = vpop.f32.mrf.mxu0
        %v976 = vadd.f32 %v835, %v975
        %977 = vmatprep.mubr.f32.mxu0 %v844
        %978 = vmatmul.mubr.f32.gmra.mxu0 %v761
        %v979 = vpop.f32.mrf.mxu0
        %v980 = vadd.f32 %v831, %v979
        %v981 = vpop.f32.mrf.mxu0
        %v982 = vadd.f32 %v835, %v981
        %983 = vmatprep.mubr.f32.mxu0 %v846
        %984 = vmatmul.mubr.f32.gmra.mxu0 %v762
        %v985 = vpop.f32.mrf.mxu0
        %v986 = vadd.f32 %v831, %v985
        %v987 = vpop.f32.mrf.mxu0
        %v988 = vadd.f32 %v835, %v987
        %989 = vmatprep.mubr.f32.mxu0 %v848
        %990 = vmatmul.mubr.f32.gmra.mxu0 %v763
        %v991 = vpop.f32.mrf.mxu0
        %v992 = vadd.f32 %v831, %v991
        %v993 = vpop.f32.mrf.mxu0
        %v994 = vadd.f32 %v835, %v993
        %995 = vmatprep.mubr.f32.mxu0 %v850
        %996 = vmatmul.mubr.f32.gmra.mxu0 %v764
        %v997 = vpop.f32.mrf.mxu0
        %v998 = vadd.f32 %v831, %v997
        %v999 = vpop.f32.mrf.mxu0
        %v1000 = vadd.f32 %v835, %v999
        %1001 = vmatprep.mubr.f32.mxu0 %v852
        %1002 = vmatmul.mubr.f32.gmra.mxu0 %v765
        %v1003 = vpop.f32.mrf.mxu0
        %v1004 = vadd.f32 %v831, %v1003
        %v1005 = vpop.f32.mrf.mxu0
        %v1006 = vadd.f32 %v835, %v1005
        %1007 = vmatprep.mubr.f32.mxu0 %v854
        %1008 = vmatmul.mubr.f32.gmra.mxu0 %v766
        %v1009 = vpop.f32.mrf.mxu0
        %v1010 = vadd.f32 %v831, %v1009
        %v1011 = vpop.f32.mrf.mxu0
        %v1012 = vadd.f32 %v835, %v1011
        %1013 = vmatprep.mubr.f32.mxu0 %v856
        %1014 = vmatmul.mubr.f32.gmra.mxu0 %v767
        %v1015 = vpop.f32.mrf.mxu0
        %v1016 = vadd.f32 %v831, %v1015
        %v1017 = vpop.f32.mrf.mxu0
        %v1018 = vadd.f32 %v835, %v1017
        %1019 = vmatprep.mubr.f32.mxu0 %v858
        %1020 = vmatmul.mubr.f32.gmra.mxu0 %v768
        %v1021 = vpop.f32.mrf.mxu0
        %v1022 = vadd.f32 %v831, %v1021
        %v1023 = vpop.f32.mrf.mxu0
        %v1024 = vadd.f32 %v835, %v1023
        %1025 = vmatprep.mubr.f32.mxu0 %v860
        %1026 = vmatmul.mubr.f32.gmra.mxu0 %v769
        %v1027 = vpop.f32.mrf.mxu0
        %v1028 = vadd.f32 %v831, %v1027
        %v1029 = vpop.f32.mrf.mxu0
        %v1030 = vadd.f32 %v835, %v1029
        %1031 = vmatprep.mubr.f32.mxu0 %v862
        %1032 = vmatmul.mubr.f32.gmra.mxu0 %v770
        %v1033 = vpop.f32.mrf.mxu0
        %v1034 = vadd.f32 %v831, %v1033
        %v1035 = vpop.f32.mrf.mxu0
        %v1036 = vadd.f32 %v835, %v1035
        %1037 = vmatprep.mubr.f32.mxu0 %v864
        %1038 = vmatmul.mubr.f32.gmra.mxu0 %v771
        %v1039 = vpop.f32.mrf.mxu0
        %v1040 = vadd.f32 %v831, %v1039
        %v1041 = vpop.f32.mrf.mxu0
        %v1042 = vadd.f32 %v835, %v1041
        %1043 = vmatprep.mubr.f32.mxu0 %v866
        %1044 = vmatmul.mubr.f32.gmra.mxu0 %v772
        %v1045 = vpop.f32.mrf.mxu0
        %v1046 = vadd.f32 %v831, %v1045
        %v1047 = vpop.f32.mrf.mxu0
        %v1048 = vadd.f32 %v835, %v1047
        %1049 = vmatprep.mubr.f32.mxu0 %v868
        %1050 = vmatmul.mubr.f32.gmra.mxu0 %v773
        %v1051 = vpop.f32.mrf.mxu0
        %v1052 = vadd.f32 %v831, %v1051
        %v1053 = vpop.f32.mrf.mxu0
        %v1054 = vadd.f32 %v835, %v1053
        %1055 = vmatprep.mubr.f32.mxu0 %v870
        %1056 = vmatmul.mubr.f32.gmra.mxu0 %v774
        %v1057 = vpop.f32.mrf.mxu0
        %v1058 = vadd.f32 %v831, %v1057
        %v1059 = vpop.f32.mrf.mxu0
        %v1060 = vadd.f32 %v835, %v1059
        %1061 = vmatprep.mubr.f32.mxu0 %v872
        %1062 = vmatmul.mubr.f32.gmra.mxu0 %v775
        %v1063 = vpop.f32.mrf.mxu0
        %v1064 = vadd.f32 %v831, %v1063
        %v1065 = vpop.f32.mrf.mxu0
        %v1066 = vadd.f32 %v835, %v1065
        %1067 = vmatprep.mubr.f32.mxu0 %v874
        %1068 = vmatmul.mubr.f32.gmra.mxu0 %v776
        %v1069 = vpop.f32.mrf.mxu0
        %v1070 = vadd.f32 %v831, %v1069
        %v1071 = vpop.f32.mrf.mxu0
        %v1072 = vadd.f32 %v835, %v1071
        %1073 = vmatprep.mubr.f32.mxu0 %v876
        %1074 = vmatmul.mubr.f32.gmra.mxu0 %v777
        %v1075 = vpop.f32.mrf.mxu0
        %v1076 = vadd.f32 %v831, %v1075
        %v1077 = vpop.f32.mrf.mxu0
        %v1078 = vadd.f32 %v835, %v1077
        %1079 = vmatprep.mubr.f32.mxu0 %v878
        %1080 = vmatmul.mubr.f32.gmra.mxu0 %v778
        %v1081 = vpop.f32.mrf.mxu0
        %v1082 = vadd.f32 %v831, %v1081
        %v1083 = vpop.f32.mrf.mxu0
        %v1084 = vadd.f32 %v835, %v1083
        %1085 = vmatprep.mubr.f32.mxu0 %v880
        %1086 = vmatmul.mubr.f32.gmra.mxu0 %v779
        %v1087 = vpop.f32.mrf.mxu0
        %v1088 = vadd.f32 %v831, %v1087
        %v1089 = vpop.f32.mrf.mxu0
        %v1090 = vadd.f32 %v835, %v1089
        %1091 = vmatprep.mubr.f32.mxu0 %v882
        %1092 = vmatmul.mubr.f32.gmra.mxu0 %v780
        %v1093 = vpop.f32.mrf.mxu0
        %v1094 = vadd.f32 %v831, %v1093
        %v1095 = vpop.f32.mrf.mxu0
        %v1096 = vadd.f32 %v835, %v1095
        %1097 = vmatprep.mubr.f32.mxu0 %v884
        %1098 = vmatmul.mubr.f32.gmra.mxu0 %v781
        %v1099 = vpop.f32.mrf.mxu0
        %v1100 = vadd.f32 %v831, %v1099
        %v1101 = vpop.f32.mrf.mxu0
        %v1102 = vadd.f32 %v835, %v1101
        %1103 = vmatprep.mubr.f32.mxu0 %v886
        %1104 = vmatmul.mubr.f32.gmra.mxu0 %v782
        %v1105 = vpop.f32.mrf.mxu0
        %v1106 = vadd.f32 %v831, %v1105
        %v1107 = vpop.f32.mrf.mxu0
        %v1108 = vadd.f32 %v835, %v1107
        %1109 = vmatprep.mubr.f32.mxu0 %v888
        %1110 = vmatmul.mubr.f32.gmra.mxu0 %v783
        %v1111 = vpop.f32.mrf.mxu0
        %v1112 = vadd.f32 %v831, %v1111
        %v1113 = vpop.f32.mrf.mxu0
        %v1114 = vadd.f32 %v835, %v1113
        %1115 = vmatprep.mubr.f32.mxu0 %v890
        %1116 = vmatmul.mubr.f32.gmra.mxu0 %v784
        %v1117 = vpop.f32.mrf.mxu0
        %v1118 = vadd.f32 %v831, %v1117
        %v1119 = vpop.f32.mrf.mxu0
        %v1120 = vadd.f32 %v835, %v1119
        %1121 = vmatprep.mubr.f32.mxu0 %v893
        %1122 = vmatmul.mubr.f32.gmra.mxu0 %v785
        %v1123 = vpop.f32.mrf.mxu0
        %v1124 = vadd.f32 %v831, %v1123
        %v1125 = vpop.f32.mrf.mxu0
        %v1126 = vadd.f32 %v835, %v1125
        %1127 = vdwg.mxu0
        %v1128 = vmax.f32 %v962, 0.0
        %v1129 = vmax.f32 %v964, 0.0
        %v1130 = vmax.f32 %v968, 0.0
        %v1131 = vmax.f32 %v970, 0.0
        %v1132 = vmax.f32 %v974, 0.0
        %v1133 = vmax.f32 %v976, 0.0
        %v1134 = vmax.f32 %v980, 0.0
        %v1135 = vmax.f32 %v982, 0.0
        %v1136 = vmax.f32 %v986, 0.0
        %v1137 = vmax.f32 %v988, 0.0
        %v1138 = vmax.f32 %v992, 0.0
        %v1139 = vmax.f32 %v994, 0.0
        %v1140 = vmax.f32 %v998, 0.0
        %v1141 = vmax.f32 %v1000, 0.0
        %v1142 = vmax.f32 %v1004, 0.0
        %v1143 = vmax.f32 %v1006, 0.0
        %v1144 = vmax.f32 %v1010, 0.0
        %v1145 = vmax.f32 %v1012, 0.0
        %v1146 = vmax.f32 %v1016, 0.0
        %v1147 = vmax.f32 %v1018, 0.0
        %v1148 = vmax.f32 %v1022, 0.0
        %v1149 = vmax.f32 %v1024, 0.0
        %v1150 = vmax.f32 %v1028, 0.0
        %v1151 = vmax.f32 %v1030, 0.0
        %v1152 = vmax.f32 %v1034, 0.0
        %v1153 = vmax.f32 %v1036, 0.0
        %v1154 = vmax.f32 %v1040, 0.0
        %v1155 = vmax.f32 %v1042, 0.0
        %v1156 = vmax.f32 %v1046, 0.0
        %v1157 = vmax.f32 %v1048, 0.0
        %v1158 = vmax.f32 %v1052, 0.0
        %v1159 = vmax.f32 %v1054, 0.0
        %v1160 = vmax.f32 %v1058, 0.0
        %v1161 = vmax.f32 %v1060, 0.0
        %v1162 = vmax.f32 %v1064, 0.0
        %v1163 = vmax.f32 %v1066, 0.0
        %v1164 = vmax.f32 %v1070, 0.0
        %v1165 = vmax.f32 %v1072, 0.0
        %v1166 = vmax.f32 %v1076, 0.0
        %v1167 = vmax.f32 %v1078, 0.0
        %v1168 = vmax.f32 %v1082, 0.0
        %v1169 = vmax.f32 %v1084, 0.0
        %v1170 = vmax.f32 %v1088, 0.0
        %v1171 = vmax.f32 %v1090, 0.0
        %v1172 = vmax.f32 %v1094, 0.0
        %v1173 = vmax.f32 %v1096, 0.0
        %v1174 = vmax.f32 %v1100, 0.0
        %v1175 = vmax.f32 %v1102, 0.0
        %v1176 = vmax.f32 %v1106, 0.0
        %v1177 = vmax.f32 %v1108, 0.0
        %v1178 = vmax.f32 %v1112, 0.0
        %v1179 = vmax.f32 %v1114, 0.0
        %v1180 = vmax.f32 %v1118, 0.0
        %v1181 = vmax.f32 %v1120, 0.0
        %v1182 = vmax.f32 %v1124, 0.0
        %v1183 = vmax.f32 %v1126, 0.0
        %v1184 = vld [vmem:[%s3] sm:$0xff]
        %v1185 = vld [vmem:[%s3 + $0x8] sm:$0xff]
        %v1186 = vld [vmem:[%s3 + $0x10] sm:$0xff]
        %v1187 = vld [vmem:[%s3 + $0x18] sm:$0xff]
        %v1188 = vld [vmem:[%s3 + $0x20] sm:$0xff]
        %v1189 = vld [vmem:[%s3 + $0x28] sm:$0xff]
        %v1190 = vld [vmem:[%s3 + $0x30] sm:$0xff]
        %v1191 = vld [vmem:[%s3 + $0x38] sm:$0xff]
        %v1192 = vld [vmem:[%s3 + $0x40] sm:$0xff]
        %v1193 = vld [vmem:[%s3 + $0x48] sm:$0xff]
        %v1194 = vld [vmem:[%s3 + $0x50] sm:$0xff]
        %v1195 = vld [vmem:[%s3 + $0x58] sm:$0xff]
        %v1196 = vld [vmem:[%s3 + $0x60] sm:$0xff]
        %v1197 = vld [vmem:[%s3 + $0x68] sm:$0xff]
        %v1198 = vld [vmem:[%s3 + $0x70] sm:$0xff]
        %v1199 = vld [vmem:[%s3 + $0x78] sm:$0xff]
        %v1200 = vld [vmem:[%s3 + $0x80] sm:$0xff]
        %v1201 = vld [vmem:[%s3 + $0x88] sm:$0xff]
        %v1202 = vld [vmem:[%s3 + $0x90] sm:$0xff]
        %v1203 = vld [vmem:[%s3 + $0x98] sm:$0xff]
        %v1204 = vld [vmem:[%s3 + $0xa0] sm:$0xff]
        %vm1205 = vcmask 326656
        %v1207 = vsel %vm1205, %v1129, 0
        %v1210 = vsel %vm1205, %v1131, 0
        %v1213 = vsel %vm1205, %v1133, 0
        %v1216 = vsel %vm1205, %v1135, 0
        %v1219 = vsel %vm1205, %v1137, 0
        %v1222 = vsel %vm1205, %v1139, 0
        %v1225 = vsel %vm1205, %v1141, 0
        %v1228 = vsel %vm1205, %v1143, 0
        %v1231 = vsel %vm1205, %v1145, 0
        %v1234 = vsel %vm1205, %v1147, 0
        %v1237 = vsel %vm1205, %v1149, 0
        %v1240 = vsel %vm1205, %v1151, 0
        %v1243 = vsel %vm1205, %v1153, 0
        %v1246 = vsel %vm1205, %v1155, 0
        %v1249 = vsel %vm1205, %v1157, 0
        %v1252 = vsel %vm1205, %v1159, 0
        %v1255 = vsel %vm1205, %v1161, 0
        %v1258 = vsel %vm1205, %v1163, 0
        %v1261 = vsel %vm1205, %v1165, 0
        %v1264 = vsel %vm1205, %v1167, 0
        %v1267 = vsel %vm1205, %v1169, 0
        %v1270 = vsel %vm1205, %v1171, 0
        %v1273 = vsel %vm1205, %v1173, 0
        %v1276 = vsel %vm1205, %v1175, 0
        %v1279 = vsel %vm1205, %v1177, 0
        %v1282 = vsel %vm1205, %v1179, 0
        %v1285 = vsel %vm1205, %v1181, 0
        %v1288 = vsel %vm1205, %v1183, 0
        %1290 = vmatprep.subr.mxu0 0.0
        %1291 = vmatpush1.msra.mxu0 %v1199
        %1292 = vmatprep.subr.mxu0 0.0
        %1293 = vmatpush1.msra.mxu0 %v1198
        %1294 = vmatprep.subr.mxu0 0.0
        %1295 = vmatpush1.msra.mxu0 %v1197
        %1296 = vmatprep.subr.mxu0 0.0
        %1297 = vmatpush1.msra.mxu0 %v1196
        %1298 = vmatprep.subr.mxu0 0.0
        %1299 = vmatpush1.msra.mxu0 %v1195
        %1300 = vmatprep.subr.mxu0 0.0
        %1301 = vmatpush1.msra.mxu0 %v1194
        %1302 = vmatprep.subr.mxu0 0.0
        %1303 = vmatpush1.msra.mxu0 %v1193
        %1304 = vmatprep.subr.mxu0 0.0
        %1305 = vmatpush1.msra.mxu0 %v1192
        %1306 = vmatprep.subr.mxu0 0.0
        %1307 = vmatpush1.msra.mxu0 %v1191
        %1308 = vmatprep.subr.mxu0 0.0
        %1309 = vmatpush1.msra.mxu0 %v1190
        %1310 = vmatprep.subr.mxu0 0.0
        %1311 = vmatpush1.msra.mxu0 %v1189
        %1312 = vmatprep.subr.mxu0 0.0
        %1313 = vmatpush1.msra.mxu0 %v1188
        %1314 = vmatprep.subr.mxu0 0.0
        %1315 = vmatpush1.msra.mxu0 %v1187
        %1316 = vmatprep.subr.mxu0 0.0
        %1317 = vmatpush1.msra.mxu0 %v1186
        %1318 = vmatprep.subr.mxu0 0.0
        %1319 = vmatpush1.msra.mxu0 %v1185
        %1320 = vmatprep.subr.mxu0 0.0
        %1321 = vmatpush1.msra.mxu0 %v1184
        %1322 = vmatprep.subr.mxu0 0.0
        %1323 = vmatpush2.msra.mxu0 0.0
        %1324 = vmatprep.subr.mxu0 0.0
        %1325 = vmatpush2.msra.mxu0 0.0
        %1326 = vmatprep.subr.mxu0 0.0
        %1327 = vmatpush2.msra.mxu0 0.0
        %1328 = vmatprep.subr.mxu0 0.0
        %1329 = vmatpush2.msra.mxu0 0.0
        %1330 = vmatprep.subr.mxu0 0.0
        %1331 = vmatpush2.msra.mxu0 0.0
        %1332 = vmatprep.subr.mxu0 0.0
        %1333 = vmatpush2.msra.mxu0 0.0
        %1334 = vmatprep.subr.mxu0 0.0
        %1335 = vmatpush2.msra.mxu0 0.0
        %1336 = vmatprep.subr.mxu0 0.0
        %1337 = vmatpush2.msra.mxu0 0.0
        %1338 = vmatprep.subr.mxu0 0.0
        %1339 = vmatpush2.msra.mxu0 0.0
        %1340 = vmatprep.subr.mxu0 0.0
        %1341 = vmatpush2.msra.mxu0 0.0
        %1342 = vmatprep.subr.mxu0 0.0
        %1343 = vmatpush2.msra.mxu0 0.0
        %1344 = vmatprep.subr.mxu0 0.0
        %1345 = vmatpush2.msra.mxu0 %v1204
        %1346 = vmatprep.subr.mxu0 0.0
        %1347 = vmatpush2.msra.mxu0 %v1203
        %1348 = vmatprep.subr.mxu0 0.0
        %1349 = vmatpush2.msra.mxu0 %v1202
        %1350 = vmatprep.subr.mxu0 0.0
        %1351 = vmatpush2.msra.mxu0 %v1201
        %1352 = vmatprep.subr.mxu0 0.0
        %1353 = vmatpush2.msra.mxu0 %v1200
        %1354 = vmatprep.mubr.f32.mxu0 %v1207
        %1355 = vmatmul.mubr.f32.gmra.mxu0 %v1128
        %v1356 = vpop.f32.mrf.mxu0
        %v1357 = vadd.f32 0.0, %v1356
        %v1358 = vpop.f32.mrf.mxu0
        %1359 = vmatprep.mubr.f32.mxu0 %v1210
        %1360 = vmatmul.mubr.f32.gmra.mxu0 %v1130
        %v1361 = vpop.f32.mrf.mxu0
        %v1362 = vadd.f32 0.0, %v1361
        %v1363 = vpop.f32.mrf.mxu0
        %1364 = vmatprep.mubr.f32.mxu0 %v1213
        %1365 = vmatmul.mubr.f32.gmra.mxu0 %v1132
        %v1366 = vpop.f32.mrf.mxu0
        %v1367 = vadd.f32 0.0, %v1366
        %v1368 = vpop.f32.mrf.mxu0
        %1369 = vmatprep.mubr.f32.mxu0 %v1216
        %1370 = vmatmul.mubr.f32.gmra.mxu0 %v1134
        %v1371 = vpop.f32.mrf.mxu0
        %v1372 = vadd.f32 0.0, %v1371
        %v1373 = vpop.f32.mrf.mxu0
        %1374 = vmatprep.mubr.f32.mxu0 %v1219
        %1375 = vmatmul.mubr.f32.gmra.mxu0 %v1136
        %v1376 = vpop.f32.mrf.mxu0
        %v1377 = vadd.f32 0.0, %v1376
        %v1378 = vpop.f32.mrf.mxu0
        %1379 = vmatprep.mubr.f32.mxu0 %v1222
        %1380 = vmatmul.mubr.f32.gmra.mxu0 %v1138
        %v1381 = vpop.f32.mrf.mxu0
        %v1382 = vadd.f32 0.0, %v1381
        %v1383 = vpop.f32.mrf.mxu0
        %1384 = vmatprep.mubr.f32.mxu0 %v1225
        %1385 = vmatmul.mubr.f32.gmra.mxu0 %v1140
        %v1386 = vpop.f32.mrf.mxu0
        %v1387 = vadd.f32 0.0, %v1386
        %v1388 = vpop.f32.mrf.mxu0
        %1389 = vmatprep.mubr.f32.mxu0 %v1228
        %1390 = vmatmul.mubr.f32.gmra.mxu0 %v1142
        %v1391 = vpop.f32.mrf.mxu0
        %v1392 = vadd.f32 0.0, %v1391
        %v1393 = vpop.f32.mrf.mxu0
        %1394 = vmatprep.mubr.f32.mxu0 %v1231
        %1395 = vmatmul.mubr.f32.gmra.mxu0 %v1144
        %v1396 = vpop.f32.mrf.mxu0
        %v1397 = vadd.f32 0.0, %v1396
        %v1398 = vpop.f32.mrf.mxu0
        %1399 = vmatprep.mubr.f32.mxu0 %v1234
        %1400 = vmatmul.mubr.f32.gmra.mxu0 %v1146
        %v1401 = vpop.f32.mrf.mxu0
        %v1402 = vadd.f32 0.0, %v1401
        %v1403 = vpop.f32.mrf.mxu0
        %1404 = vmatprep.mubr.f32.mxu0 %v1237
        %1405 = vmatmul.mubr.f32.gmra.mxu0 %v1148
        %v1406 = vpop.f32.mrf.mxu0
        %v1407 = vadd.f32 0.0, %v1406
        %v1408 = vpop.f32.mrf.mxu0
        %1409 = vmatprep.mubr.f32.mxu0 %v1240
        %1410 = vmatmul.mubr.f32.gmra.mxu0 %v1150
        %v1411 = vpop.f32.mrf.mxu0
        %v1412 = vadd.f32 0.0, %v1411
        %v1413 = vpop.f32.mrf.mxu0
        %1414 = vmatprep.mubr.f32.mxu0 %v1243
        %1415 = vmatmul.mubr.f32.gmra.mxu0 %v1152
        %v1416 = vpop.f32.mrf.mxu0
        %v1417 = vadd.f32 0.0, %v1416
        %v1418 = vpop.f32.mrf.mxu0
        %1419 = vmatprep.mubr.f32.mxu0 %v1246
        %1420 = vmatmul.mubr.f32.gmra.mxu0 %v1154
        %v1421 = vpop.f32.mrf.mxu0
        %v1422 = vadd.f32 0.0, %v1421
        %v1423 = vpop.f32.mrf.mxu0
        %1424 = vmatprep.mubr.f32.mxu0 %v1249
        %1425 = vmatmul.mubr.f32.gmra.mxu0 %v1156
        %v1426 = vpop.f32.mrf.mxu0
        %v1427 = vadd.f32 0.0, %v1426
        %v1428 = vpop.f32.mrf.mxu0
        %1429 = vmatprep.mubr.f32.mxu0 %v1252
        %1430 = vmatmul.mubr.f32.gmra.mxu0 %v1158
        %v1431 = vpop.f32.mrf.mxu0
        %v1432 = vadd.f32 0.0, %v1431
        %v1433 = vpop.f32.mrf.mxu0
        %1434 = vmatprep.mubr.f32.mxu0 %v1255
        %1435 = vmatmul.mubr.f32.gmra.mxu0 %v1160
        %v1436 = vpop.f32.mrf.mxu0
        %v1437 = vadd.f32 0.0, %v1436
        %v1438 = vpop.f32.mrf.mxu0
        %1439 = vmatprep.mubr.f32.mxu0 %v1258
        %1440 = vmatmul.mubr.f32.gmra.mxu0 %v1162
        %v1441 = vpop.f32.mrf.mxu0
        %v1442 = vadd.f32 0.0, %v1441
        %v1443 = vpop.f32.mrf.mxu0
        %1444 = vmatprep.mubr.f32.mxu0 %v1261
        %1445 = vmatmul.mubr.f32.gmra.mxu0 %v1164
        %v1446 = vpop.f32.mrf.mxu0
        %v1447 = vadd.f32 0.0, %v1446
        %v1448 = vpop.f32.mrf.mxu0
        %1449 = vmatprep.mubr.f32.mxu0 %v1264
        %1450 = vmatmul.mubr.f32.gmra.mxu0 %v1166
        %v1451 = vpop.f32.mrf.mxu0
        %v1452 = vadd.f32 0.0, %v1451
        %v1453 = vpop.f32.mrf.mxu0
        %1454 = vmatprep.mubr.f32.mxu0 %v1267
        %1455 = vmatmul.mubr.f32.gmra.mxu0 %v1168
        %v1456 = vpop.f32.mrf.mxu0
        %v1457 = vadd.f32 0.0, %v1456
        %v1458 = vpop.f32.mrf.mxu0
        %1459 = vmatprep.mubr.f32.mxu0 %v1270
        %1460 = vmatmul.mubr.f32.gmra.mxu0 %v1170
        %v1461 = vpop.f32.mrf.mxu0
        %v1462 = vadd.f32 0.0, %v1461
        %v1463 = vpop.f32.mrf.mxu0
        %1464 = vmatprep.mubr.f32.mxu0 %v1273
        %1465 = vmatmul.mubr.f32.gmra.mxu0 %v1172
        %v1466 = vpop.f32.mrf.mxu0
        %v1467 = vadd.f32 0.0, %v1466
        %v1468 = vpop.f32.mrf.mxu0
        %1469 = vmatprep.mubr.f32.mxu0 %v1276
        %1470 = vmatmul.mubr.f32.gmra.mxu0 %v1174
        %v1471 = vpop.f32.mrf.mxu0
        %v1472 = vadd.f32 0.0, %v1471
        %v1473 = vpop.f32.mrf.mxu0
        %1474 = vmatprep.mubr.f32.mxu0 %v1279
        %1475 = vmatmul.mubr.f32.gmra.mxu0 %v1176
        %v1476 = vpop.f32.mrf.mxu0
        %v1477 = vadd.f32 0.0, %v1476
        %v1478 = vpop.f32.mrf.mxu0
        %1479 = vmatprep.mubr.f32.mxu0 %v1282
        %1480 = vmatmul.mubr.f32.gmra.mxu0 %v1178
        %v1481 = vpop.f32.mrf.mxu0
        %v1482 = vadd.f32 0.0, %v1481
        %v1483 = vpop.f32.mrf.mxu0
        %1484 = vmatprep.mubr.f32.mxu0 %v1285
        %1485 = vmatmul.mubr.f32.gmra.mxu0 %v1180
        %v1486 = vpop.f32.mrf.mxu0
        %v1487 = vadd.f32 0.0, %v1486
        %v1488 = vpop.f32.mrf.mxu0
        %1489 = vmatprep.mubr.f32.mxu0 %v1288
        %1490 = vmatmul.mubr.f32.gmra.mxu0 %v1182
        %v1491 = vpop.f32.mrf.mxu0
        %v1492 = vadd.f32 0.0, %v1491
        %v1493 = vpop.f32.mrf.mxu0
        %1494 = vdwg.mxu0
        %v1495 = vadd.f32 %v1357, %v1362
        %v1496 = vmul.f32 %v1495, 0.5
        %v1497 = vadd.f32 %v1367, %v1372
        %v1498 = vmul.f32 %v1497, 0.5
        %v1499 = vadd.f32 %v1377, %v1382
        %v1500 = vmul.f32 %v1499, 0.5
        %v1501 = vadd.f32 %v1387, %v1392
        %v1502 = vmul.f32 %v1501, 0.5
        %v1503 = vadd.f32 %v1397, %v1402
        %v1504 = vmul.f32 %v1503, 0.5
        %v1505 = vadd.f32 %v1407, %v1412
        %v1506 = vmul.f32 %v1505, 0.5
        %v1507 = vadd.f32 %v1417, %v1422
        %v1508 = vmul.f32 %v1507, 0.5
        %v1509 = vadd.f32 %v1427, %v1432
        %v1510 = vmul.f32 %v1509, 0.5
        %v1511 = vadd.f32 %v1437, %v1442
        %v1512 = vmul.f32 %v1511, 0.5
        %v1513 = vadd.f32 %v1447, %v1452
        %v1514 = vmul.f32 %v1513, 0.5
        %v1515 = vadd.f32 %v1457, %v1462
        %v1516 = vmul.f32 %v1515, 0.5
        %v1517 = vadd.f32 %v1467, %v1472
        %v1518 = vmul.f32 %v1517, 0.5
        %v1519 = vadd.f32 %v1477, %v1482
        %v1520 = vmul.f32 %v1519, 0.5
        %v1521 = vadd.f32 %v1487, %v1492
        %v1522 = vmul.f32 %v1521, 0.5
        %1533 = vrot.lane.b32.xlu0 %v1498, 84
        %v1534 = vpop.permute.xlu0 %1533
        %1535 = vrot.lane.b32.xlu0 %v1500, 84
        %v1536 = vpop.permute.xlu0 %1535
        %1537 = vrot.lane.b32.xlu0 %v1502, 84
        %v1538 = vpop.permute.xlu0 %1537
        %1539 = vrot.lane.b32.xlu0 %v1504, 84
        %v1540 = vpop.permute.xlu0 %1539
        %1541 = vrot.lane.b32.xlu0 %v1506, 84
        %v1542 = vpop.permute.xlu0 %1541
        %1543 = vrot.lane.b32.xlu0 %v1508, 84
        %v1544 = vpop.permute.xlu0 %1543
        %1545 = vrot.lane.b32.xlu0 %v1510, 84
        %v1546 = vpop.permute.xlu0 %1545
        %1547 = vrot.lane.b32.xlu0 %v1512, 84
        %v1548 = vpop.permute.xlu0 %1547
        %1549 = vrot.lane.b32.xlu0 %v1514, 84
        %v1550 = vpop.permute.xlu0 %1549
        %1551 = vrot.lane.b32.xlu0 %v1516, 84
        %v1552 = vpop.permute.xlu0 %1551
        %1564 = vrot.lane.b32.xlu0 %v1500, 40
        %v1565 = vpop.permute.xlu0 %1564
        %1566 = vrot.lane.b32.xlu0 %v1502, 40
        %v1567 = vpop.permute.xlu0 %1566
        %1568 = vrot.lane.b32.xlu0 %v1504, 40
        %v1569 = vpop.permute.xlu0 %1568
        %1570 = vrot.lane.b32.xlu0 %v1506, 40
        %v1571 = vpop.permute.xlu0 %1570
        %1572 = vrot.lane.b32.xlu0 %v1508, 40
        %v1573 = vpop.permute.xlu0 %1572
        %1574 = vrot.lane.b32.xlu0 %v1510, 40
        %v1575 = vpop.permute.xlu0 %1574
        %1576 = vrot.lane.b32.xlu0 %v1512, 40
        %v1577 = vpop.permute.xlu0 %1576
        %1578 = vrot.lane.b32.xlu0 %v1514, 40
        %v1579 = vpop.permute.xlu0 %1578
        %1580 = vrot.lane.b32.xlu0 %v1516, 40
        %v1581 = vpop.permute.xlu0 %1580
        %1582 = vrot.lane.b32.xlu0 %v1518, 40
        %v1583 = vpop.permute.xlu0 %1582
        %1595 = vrot.lane.b32.xlu0 %v1502, 124
        %v1596 = vpop.permute.xlu0 %1595
        %1597 = vrot.lane.b32.xlu0 %v1504, 124
        %v1598 = vpop.permute.xlu0 %1597
        %1599 = vrot.lane.b32.xlu0 %v1506, 124
        %v1600 = vpop.permute.xlu0 %1599
        %1601 = vrot.lane.b32.xlu0 %v1508, 124
        %v1602 = vpop.permute.xlu0 %1601
        %1603 = vrot.lane.b32.xlu0 %v1510, 124
        %v1604 = vpop.permute.xlu0 %1603
        %1605 = vrot.lane.b32.xlu0 %v1512, 124
        %v1606 = vpop.permute.xlu0 %1605
        %1607 = vrot.lane.b32.xlu0 %v1514, 124
        %v1608 = vpop.permute.xlu0 %1607
        %1609 = vrot.lane.b32.xlu0 %v1516, 124
        %v1610 = vpop.permute.xlu0 %1609
        %1611 = vrot.lane.b32.xlu0 %v1518, 124
        %v1612 = vpop.permute.xlu0 %1611
        %1613 = vrot.lane.b32.xlu0 %v1520, 124
        %v1614 = vpop.permute.xlu0 %1613
        %1626 = vrot.lane.b32.xlu0 %v1504, 80
        %v1627 = vpop.permute.xlu0 %1626
        %1628 = vrot.lane.b32.xlu0 %v1506, 80
        %v1629 = vpop.permute.xlu0 %1628
        %1630 = vrot.lane.b32.xlu0 %v1508, 80
        %v1631 = vpop.permute.xlu0 %1630
        %1632 = vrot.lane.b32.xlu0 %v1510, 80
        %v1633 = vpop.permute.xlu0 %1632
        %1634 = vrot.lane.b32.xlu0 %v1512, 80
        %v1635 = vpop.permute.xlu0 %1634
        %1636 = vrot.lane.b32.xlu0 %v1514, 80
        %v1637 = vpop.permute.xlu0 %1636
        %1638 = vrot.lane.b32.xlu0 %v1516, 80
        %v1639 = vpop.permute.xlu0 %1638
        %1640 = vrot.lane.b32.xlu0 %v1518, 80
        %v1641 = vpop.permute.xlu0 %1640
        %1642 = vrot.lane.b32.xlu0 %v1520, 80
        %v1643 = vpop.permute.xlu0 %1642
        %1644 = vrot.lane.b32.xlu0 %v1522, 80
        %v1645 = vpop.permute.xlu0 %1644
        %vm1656 = vcmask 687104
        %v1657 = vsel %vm1656, %v1496, %v1534
        %v1658 = vsel %vm1656, %v1498, %v1536
        %v1659 = vsel %vm1656, %v1500, %v1538
        %v1660 = vsel %vm1656, %v1502, %v1540
        %v1661 = vsel %vm1656, %v1504, %v1542
        %v1662 = vsel %vm1656, %v1506, %v1544
        %v1663 = vsel %vm1656, %v1508, %v1546
        %v1664 = vsel %vm1656, %v1510, %v1548
        %v1665 = vsel %vm1656, %v1512, %v1550
        %v1666 = vsel %vm1656, %v1514, %v1552
        %v1667 = vsel %vm1205, %v1534, %v1565
        %v1668 = vsel %vm1205, %v1536, %v1567
        %v1669 = vsel %vm1205, %v1538, %v1569
        %v1670 = vsel %vm1205, %v1540, %v1571
        %v1671 = vsel %vm1205, %v1542, %v1573
        %v1672 = vsel %vm1205, %v1544, %v1575
        %v1673 = vsel %vm1205, %v1546, %v1577
        %v1674 = vsel %vm1205, %v1548, %v1579
        %v1675 = vsel %vm1205, %v1550, %v1581
        %v1676 = vsel %vm1205, %v1552, %v1583
        %vm1677 = vcmask 1014784
        %v1678 = vsel %vm1677, %v1667, %v1596
        %v1679 = vsel %vm1677, %v1668, %v1598
        %v1680 = vsel %vm1677, %v1669, %v1600
        %v1681 = vsel %vm1677, %v1670, %v1602
        %v1682 = vsel %vm1677, %v1671, %v1604
        %v1683 = vsel %vm1677, %v1672, %v1606
        %v1684 = vsel %vm1677, %v1673, %v1608
        %v1685 = vsel %vm1677, %v1674, %v1610
        %v1686 = vsel %vm1677, %v1675, %v1612
        %v1687 = vsel %vm1677, %v1676, %v1614
        %vm1688 = vcmask 654336
        %v1689 = vsel %vm1688, %v1596, %v1627
        %v1690 = vsel %vm1688, %v1598, %v1629
        %v1691 = vsel %vm1688, %v1600, %v1631
        %v1692 = vsel %vm1688, %v1602, %v1633
        %v1693 = vsel %vm1688, %v1604, %v1635
        %v1694 = vsel %vm1688, %v1606, %v1637
        %v1695 = vsel %vm1688, %v1608, %v1639
        %v1696 = vsel %vm1688, %v1610, %v1641
        %v1697 = vsel %vm1688, %v1612, %v1643
        %v1698 = vsel %vm1688, %v1614, %v1645
        %v1699 = vld [vmem:[%s4] sm:$0xff]
        %v1700 = vld [vmem:[%s4 + $0x8] sm:$0xff]
        %v1701 = vld [vmem:[%s4 + $0x10] sm:$0xff]
        %v1702 = vld [vmem:[%s4 + $0x18] sm:$0xff]
        %v1703 = vld [vmem:[%s4 + $0x20] sm:$0xff]
        %v1704 = vld [vmem:[%s4 + $0x28] sm:$0xff]
        %v1705 = vld [vmem:[%s4 + $0x30] sm:$0xff]
        %v1706 = vld [vmem:[%s4 + $0x38] sm:$0xff]
        %v1707 = vld [vmem:[%s4 + $0x40] sm:$0xff]
        %v1708 = vld [vmem:[%s4 + $0x48] sm:$0xff]
        %v1709 = vld [vmem:[%s4 + $0x50] sm:$0xff]
        %v1710 = vld [vmem:[%s4 + $0x58] sm:$0xff]
        %v1711 = vld [vmem:[%s4 + $0x60] sm:$0xff]
        %v1712 = vld [vmem:[%s4 + $0x68] sm:$0xff]
        %v1713 = vld [vmem:[%s4 + $0x70] sm:$0xff]
        %v1714 = vld [vmem:[%s4 + $0x78] sm:$0xff]
        %v1715 = vld [vmem:[%s4 + $0x80] sm:$0xff]
        %v1716 = vld [vmem:[%s4 + $0x88] sm:$0xff]
        %v1717 = vld [vmem:[%s4 + $0x90] sm:$0xff]
        %v1718 = vld [vmem:[%s4 + $0x98] sm:$0xff]
        %v1719 = vld [vmem:[%s4 + $0xa0] sm:$0xff]
        %v1720 = vld [vmem:[%s4 + $0xa8] sm:$0xff]
        %v1721 = vld [vmem:[%s4 + $0xb0] sm:$0xff]
        %v1722 = vld [vmem:[%s4 + $0xb8] sm:$0xff]
        %v1723 = vld [vmem:[%s4 + $0xc0] sm:$0xff]
        %v1724 = vld [vmem:[%s4 + $0xc8] sm:$0xff]
        %v1725 = vld [vmem:[%s4 + $0xd0] sm:$0xff]
        %v1726 = vld [vmem:[%s4 + $0xd8] sm:$0xff]
        %v1727 = vld [vmem:[%s4 + $0xe0] sm:$0xff]
        %v1728 = vld [vmem:[%s4 + $0xe8] sm:$0xff]
        %v1729 = vld [vmem:[%s4 + $0xf0] sm:$0xff]
        %v1730 = vld [vmem:[%s4 + $0xf8] sm:$0xff]
        %v1731 = vld [vmem:[%s4 + $0x100] sm:$0xff]
        %v1732 = vld [vmem:[%s4 + $0x108] sm:$0xff]
        %v1733 = vld [vmem:[%s4 + $0x110] sm:$0xff]
        %v1734 = vld [vmem:[%s4 + $0x118] sm:$0xff]
        %v1735 = vld [vmem:[%s4 + $0x120] sm:$0xff]
        %v1736 = vld [vmem:[%s4 + $0x128] sm:$0xff]
        %v1737 = vld [vmem:[%s4 + $0x130] sm:$0xff]
        %v1738 = vld [vmem:[%s4 + $0x138] sm:$0xff]
        %v1739 = vld [vmem:[%s4 + $0x140] sm:$0xff]
        %v1740 = vld [vmem:[%s4 + $0x148] sm:$0xff]
        %v1741 = vld [vmem:[%s4 + $0x150] sm:$0xff]
        %v1742 = vld [vmem:[%s4 + $0x158] sm:$0xff]
        %v1743 = vld [vmem:[%s4 + $0x160] sm:$0xff]
        %v1744 = vld [vmem:[%s4 + $0x168] sm:$0xff]
        %v1745 = vld [vmem:[%s4 + $0x170] sm:$0xff]
        %v1746 = vld [vmem:[%s4 + $0x178] sm:$0xff]
        %v1747 = vld [vmem:[%s4 + $0x180] sm:$0xff]
        %v1748 = vld [vmem:[%s4 + $0x188] sm:$0xff]
        %v1749 = vld [vmem:[%s4 + $0x190] sm:$0xff]
        %v1750 = vld [vmem:[%s4 + $0x198] sm:$0xff]
        %v1751 = vld [vmem:[%s4 + $0x1a0] sm:$0xff]
        %v1752 = vld [vmem:[%s4 + $0x1a8] sm:$0xff]
        %v1753 = vld [vmem:[%s4 + $0x1b0] sm:$0xff]
        %v1754 = vld [vmem:[%s4 + $0x1b8] sm:$0xff]
        %v1755 = vld [vmem:[%s4 + $0x1c0] sm:$0xff]
        %v1756 = vld [vmem:[%s4 + $0x1c8] sm:$0xff]
        %v1757 = vld [vmem:[%s4 + $0x1d0] sm:$0xff]
        %v1758 = vld [vmem:[%s4 + $0x1d8] sm:$0xff]
        %v1759 = vld [vmem:[%s4 + $0x1e0] sm:$0xff]
        %v1760 = vld [vmem:[%s4 + $0x1e8] sm:$0xff]
        %v1761 = vld [vmem:[%s4 + $0x1f0] sm:$0xff]
        %v1762 = vld [vmem:[%s4 + $0x1f8] sm:$0xff]
        %v1763 = vld [vmem:[%s4 + $0x200] sm:$0xff]
        %v1764 = vld [vmem:[%s4 + $0x208] sm:$0xff]
        %v1765 = vld [vmem:[%s4 + $0x210] sm:$0xff]
        %v1766 = vld [vmem:[%s4 + $0x218] sm:$0xff]
        %v1767 = vld [vmem:[%s4 + $0x220] sm:$0xff]
        %v1768 = vld [vmem:[%s4 + $0x228] sm:$0xff]
        %v1769 = vld [vmem:[%s4 + $0x230] sm:$0xff]
        %v1770 = vld [vmem:[%s4 + $0x238] sm:$0xff]
        %v1771 = vld [vmem:[%s4 + $0x240] sm:$0xff]
        %v1772 = vld [vmem:[%s4 + $0x248] sm:$0xff]
        %v1773 = vld [vmem:[%s4 + $0x250] sm:$0xff]
        %v1774 = vld [vmem:[%s4 + $0x258] sm:$0xff]
        %v1775 = vld [vmem:[%s4 + $0x260] sm:$0xff]
        %v1776 = vld [vmem:[%s4 + $0x268] sm:$0xff]
        %v1777 = vld [vmem:[%s4 + $0x270] sm:$0xff]
        %v1778 = vld [vmem:[%s4 + $0x278] sm:$0xff]
        %v1779 = vld [vmem:[%s4 + $0x280] sm:$0xff]
        %v1780 = vld [vmem:[%s4 + $0x288] sm:$0xff]
        %v1781 = vld [vmem:[%s4 + $0x290] sm:$0xff]
        %v1782 = vld [vmem:[%s4 + $0x298] sm:$0xff]
        %v1783 = vld [vmem:[%s4 + $0x2a0] sm:$0xff]
        %v1784 = vld [vmem:[%s4 + $0x2a8] sm:$0xff]
        %v1785 = vld [vmem:[%s4 + $0x2b0] sm:$0xff]
        %v1786 = vld [vmem:[%s4 + $0x2b8] sm:$0xff]
        %v1787 = vld [vmem:[%s4 + $0x2c0] sm:$0xff]
        %v1788 = vld [vmem:[%s4 + $0x2c8] sm:$0xff]
        %v1789 = vld [vmem:[%s4 + $0x2d0] sm:$0xff]
        %v1790 = vld [vmem:[%s4 + $0x2d8] sm:$0xff]
        %v1791 = vld [vmem:[%s4 + $0x2e0] sm:$0xff]
        %v1792 = vld [vmem:[%s4 + $0x2e8] sm:$0xff]
        %v1793 = vld [vmem:[%s4 + $0x2f0] sm:$0xff]
        %v1794 = vld [vmem:[%s4 + $0x2f8] sm:$0xff]
        %v1795 = vld [vmem:[%s4 + $0x300] sm:$0xff]
        %v1796 = vld [vmem:[%s4 + $0x308] sm:$0xff]
        %v1797 = vld [vmem:[%s4 + $0x310] sm:$0xff]
        %v1798 = vld [vmem:[%s4 + $0x318] sm:$0xff]
        %v1799 = vld [vmem:[%s4 + $0x320] sm:$0xff]
        %v1800 = vld [vmem:[%s4 + $0x328] sm:$0xff]
        %v1801 = vld [vmem:[%s4 + $0x330] sm:$0xff]
        %v1802 = vld [vmem:[%s4 + $0x338] sm:$0xff]
        %v1803 = vld [vmem:[%s4 + $0x340] sm:$0xf]
        %v1804 = vld [vmem:[%s4 + $0x348] sm:$0xf]
        %v1805 = vld [vmem:[%s5] sm:$0x3]
        %v1807 = vlaneseq
        %v1808 = vshrl.u32 %v1807, 7
        %v1809 = vsub.s32 0, %v1808
        %v1810 = vrot.slane %v1805, %v1809
        %v1811 = vlaneseq
        %v1812 = vshrl.u32 %v1811, 7
        %v1813 = vsub.s32 1, %v1812
        %v1814 = vrot.slane %v1805, %v1813
        %vm1817 = vcmask 293888
        %v1818 = vsel %vm1817, %v1627, 0
        %v1820 = vsel %vm1817, %v1629, 0
        %v1822 = vsel %vm1817, %v1631, 0
        %v1824 = vsel %vm1817, %v1633, 0
        %v1826 = vsel %vm1817, %v1635, 0
        %v1828 = vsel %vm1817, %v1637, 0
        %v1830 = vsel %vm1817, %v1639, 0
        %v1832 = vsel %vm1817, %v1641, 0
        %v1834 = vsel %vm1817, %v1643, 0
        %v1836 = vsel %vm1817, %v1645, 0
        %vm1838 = vcmask 1043456
        %v1840 = vsel %vm1838, %v1803, 0
        %v1843 = vsel %vm1838, %v1804, 0
        %1845 = vmatprep.subr.mxu0 %v1730
        %1846 = vmatpush1.msra.mxu0 %v1729
        %1847 = vmatprep.subr.mxu0 %v1728
        %1848 = vmatpush1.msra.mxu0 %v1727
        %1849 = vmatprep.subr.mxu0 %v1726
        %1850 = vmatpush1.msra.mxu0 %v1725
        %1851 = vmatprep.subr.mxu0 %v1724
        %1852 = vmatpush1.msra.mxu0 %v1723
        %1853 = vmatprep.subr.mxu0 %v1722
        %1854 = vmatpush1.msra.mxu0 %v1721
        %1855 = vmatprep.subr.mxu0 %v1720
        %1856 = vmatpush1.msra.mxu0 %v1719
        %1857 = vmatprep.subr.mxu0 %v1718
        %1858 = vmatpush1.msra.mxu0 %v1717
        %1859 = vmatprep.subr.mxu0 %v1716
        %1860 = vmatpush1.msra.mxu0 %v1715
        %1861 = vmatprep.subr.mxu0 %v1714
        %1862 = vmatpush1.msra.mxu0 %v1713
        %1863 = vmatprep.subr.mxu0 %v1712
        %1864 = vmatpush1.msra.mxu0 %v1711
        %1865 = vmatprep.subr.mxu0 %v1710
        %1866 = vmatpush1.msra.mxu0 %v1709
        %1867 = vmatprep.subr.mxu0 %v1708
        %1868 = vmatpush1.msra.mxu0 %v1707
        %1869 = vmatprep.subr.mxu0 %v1706
        %1870 = vmatpush1.msra.mxu0 %v1705
        %1871 = vmatprep.subr.mxu0 %v1704
        %1872 = vmatpush1.msra.mxu0 %v1703
        %1873 = vmatprep.subr.mxu0 %v1702
        %1874 = vmatpush1.msra.mxu0 %v1701
        %1875 = vmatprep.subr.mxu0 %v1700
        %1876 = vmatpush1.msra.mxu0 %v1699
        %1877 = vmatprep.subr.mxu0 %v1762
        %1878 = vmatpush2.msra.mxu0 %v1761
        %1879 = vmatprep.subr.mxu0 %v1760
        %1880 = vmatpush2.msra.mxu0 %v1759
        %1881 = vmatprep.subr.mxu0 %v1758
        %1882 = vmatpush2.msra.mxu0 %v1757
        %1883 = vmatprep.subr.mxu0 %v1756
        %1884 = vmatpush2.msra.mxu0 %v1755
        %1885 = vmatprep.subr.mxu0 %v1754
        %1886 = vmatpush2.msra.mxu0 %v1753
        %1887 = vmatprep.subr.mxu0 %v1752
        %1888 = vmatpush2.msra.mxu0 %v1751
        %1889 = vmatprep.subr.mxu0 %v1750
        %1890 = vmatpush2.msra.mxu0 %v1749
        %1891 = vmatprep.subr.mxu0 %v1748
        %1892 = vmatpush2.msra.mxu0 %v1747
        %1893 = vmatprep.subr.mxu0 %v1746
        %1894 = vmatpush2.msra.mxu0 %v1745
        %1895 = vmatprep.subr.mxu0 %v1744
        %1896 = vmatpush2.msra.mxu0 %v1743
        %1897 = vmatprep.subr.mxu0 %v1742
        %1898 = vmatpush2.msra.mxu0 %v1741
        %1899 = vmatprep.subr.mxu0 %v1740
        %1900 = vmatpush2.msra.mxu0 %v1739
        %1901 = vmatprep.subr.mxu0 %v1738
        %1902 = vmatpush2.msra.mxu0 %v1737
        %1903 = vmatprep.subr.mxu0 %v1736
        %1904 = vmatpush2.msra.mxu0 %v1735
        %1905 = vmatprep.subr.mxu0 %v1734
        %1906 = vmatpush2.msra.mxu0 %v1733
        %1907 = vmatprep.subr.mxu0 %v1732
        %1908 = vmatpush2.msra.mxu0 %v1731
        %1909 = vmatprep.mubr.f32.mxu0 %v1678
        %1910 = vmatmul.mubr.f32.gmra.mxu0 %v1657
        %v1911 = vpop.f32.mrf.mxu0
        %v1912 = vadd.f32 %v1810, %v1911
        %v1913 = vpop.f32.mrf.mxu0
        %v1914 = vadd.f32 %v1814, %v1913
        %1915 = vmatprep.mubr.f32.mxu0 %v1679
        %1916 = vmatmul.mubr.f32.gmra.mxu0 %v1658
        %v1917 = vpop.f32.mrf.mxu0
        %v1918 = vadd.f32 %v1810, %v1917
        %v1919 = vpop.f32.mrf.mxu0
        %v1920 = vadd.f32 %v1814, %v1919
        %1921 = vmatprep.mubr.f32.mxu0 %v1680
        %1922 = vmatmul.mubr.f32.gmra.mxu0 %v1659
        %v1923 = vpop.f32.mrf.mxu0
        %v1924 = vadd.f32 %v1810, %v1923
        %v1925 = vpop.f32.mrf.mxu0
        %v1926 = vadd.f32 %v1814, %v1925
        %1927 = vmatprep.mubr.f32.mxu0 %v1681
        %1928 = vmatmul.mubr.f32.gmra.mxu0 %v1660
        %v1929 = vpop.f32.mrf.mxu0
        %v1930 = vadd.f32 %v1810, %v1929
        %v1931 = vpop.f32.mrf.mxu0
        %v1932 = vadd.f32 %v1814, %v1931
        %1933 = vmatprep.mubr.f32.mxu0 %v1682
        %1934 = vmatmul.mubr.f32.gmra.mxu0 %v1661
        %v1935 = vpop.f32.mrf.mxu0
        %v1936 = vadd.f32 %v1810, %v1935
        %v1937 = vpop.f32.mrf.mxu0
        %v1938 = vadd.f32 %v1814, %v1937
        %1939 = vmatprep.mubr.f32.mxu0 %v1683
        %1940 = vmatmul.mubr.f32.gmra.mxu0 %v1662
        %v1941 = vpop.f32.mrf.mxu0
        %v1942 = vadd.f32 %v1810, %v1941
        %v1943 = vpop.f32.mrf.mxu0
        %v1944 = vadd.f32 %v1814, %v1943
        %1945 = vmatprep.mubr.f32.mxu0 %v1684
        %1946 = vmatmul.mubr.f32.gmra.mxu0 %v1663
        %v1947 = vpop.f32.mrf.mxu0
        %v1948 = vadd.f32 %v1810, %v1947
        %v1949 = vpop.f32.mrf.mxu0
        %v1950 = vadd.f32 %v1814, %v1949
        %1951 = vmatprep.mubr.f32.mxu0 %v1685
        %1952 = vmatmul.mubr.f32.gmra.mxu0 %v1664
        %v1953 = vpop.f32.mrf.mxu0
        %v1954 = vadd.f32 %v1810, %v1953
        %v1955 = vpop.f32.mrf.mxu0
        %v1956 = vadd.f32 %v1814, %v1955
        %1957 = vmatprep.mubr.f32.mxu0 %v1686
        %1958 = vmatmul.mubr.f32.gmra.mxu0 %v1665
        %v1959 = vpop.f32.mrf.mxu0
        %v1960 = vadd.f32 %v1810, %v1959
        %v1961 = vpop.f32.mrf.mxu0
        %v1962 = vadd.f32 %v1814, %v1961
        %1963 = vmatprep.mubr.f32.mxu0 %v1687
        %1964 = vmatmul.mubr.f32.gmra.mxu0 %v1666
        %v1965 = vpop.f32.mrf.mxu0
        %v1966 = vadd.f32 %v1810, %v1965
        %v1967 = vpop.f32.mrf.mxu0
        %v1968 = vadd.f32 %v1814, %v1967
        %1969 = vdwg.mxu0
        %1970 = vmatprep.subr.mxu0 %v1794
        %1971 = vmatpush1.msra.mxu0 %v1793
        %1972 = vmatprep.subr.mxu0 %v1792
        %1973 = vmatpush1.msra.mxu0 %v1791
        %1974 = vmatprep.subr.mxu0 %v1790
        %1975 = vmatpush1.msra.mxu0 %v1789
        %1976 = vmatprep.subr.mxu0 %v1788
        %1977 = vmatpush1.msra.mxu0 %v1787
        %1978 = vmatprep.subr.mxu0 %v1786
        %1979 = vmatpush1.msra.mxu0 %v1785
        %1980 = vmatprep.subr.mxu0 %v1784
        %1981 = vmatpush1.msra.mxu0 %v1783
        %1982 = vmatprep.subr.mxu0 %v1782
        %1983 = vmatpush1.msra.mxu0 %v1781
        %1984 = vmatprep.subr.mxu0 %v1780
        %1985 = vmatpush1.msra.mxu0 %v1779
        %1986 = vmatprep.subr.mxu0 %v1778
        %1987 = vmatpush1.msra.mxu0 %v1777
        %1988 = vmatprep.subr.mxu0 %v1776
        %1989 = vmatpush1.msra.mxu0 %v1775
        %1990 = vmatprep.subr.mxu0 %v1774
        %1991 = vmatpush1.msra.mxu0 %v1773
        %1992 = vmatprep.subr.mxu0 %v1772
        %1993 = vmatpush1.msra.mxu0 %v1771
        %1994 = vmatprep.subr.mxu0 %v1770
        %1995 = vmatpush1.msra.mxu0 %v1769
        %1996 = vmatprep.subr.mxu0 %v1768
        %1997 = vmatpush1.msra.mxu0 %v1767
        %1998 = vmatprep.subr.mxu0 %v1766
        %1999 = vmatpush1.msra.mxu0 %v1765
        %2000 = vmatprep.subr.mxu0 %v1764
        %2001 = vmatpush1.msra.mxu0 %v1763
        %2002 = vmatprep.subr.mxu0 0.0
        %2003 = vmatpush2.msra.mxu0 0.0
        %2004 = vmatprep.subr.mxu0 0.0
        %2005 = vmatpush2.msra.mxu0 0.0
        %2006 = vmatprep.subr.mxu0 0.0
        %2007 = vmatpush2.msra.mxu0 0.0
        %2008 = vmatprep.subr.mxu0 0.0
        %2009 = vmatpush2.msra.mxu0 0.0
        %2010 = vmatprep.subr.mxu0 0.0
        %2011 = vmatpush2.msra.mxu0 0.0
        %2012 = vmatprep.subr.mxu0 0.0
        %2013 = vmatpush2.msra.mxu0 0.0
        %2014 = vmatprep.subr.mxu0 0.0
        %2015 = vmatpush2.msra.mxu0 0.0
        %2016 = vmatprep.subr.mxu0 0.0
        %2017 = vmatpush2.msra.mxu0 0.0
        %2018 = vmatprep.subr.mxu0 0.0
        %2019 = vmatpush2.msra.mxu0 0.0
        %2020 = vmatprep.subr.mxu0 0.0
        %2021 = vmatpush2.msra.mxu0 0.0
        %2022 = vmatprep.subr.mxu0 0.0
        %2023 = vmatpush2.msra.mxu0 0.0
        %2024 = vmatprep.subr.mxu0 %v1843
        %2025 = vmatpush2.msra.mxu0 %v1840
        %2026 = vmatprep.subr.mxu0 %v1802
        %2027 = vmatpush2.msra.mxu0 %v1801
        %2028 = vmatprep.subr.mxu0 %v1800
        %2029 = vmatpush2.msra.mxu0 %v1799
        %2030 = vmatprep.subr.mxu0 %v1798
        %2031 = vmatpush2.msra.mxu0 %v1797
        %2032 = vmatprep.subr.mxu0 %v1796
        %2033 = vmatpush2.msra.mxu0 %v1795
        %2034 = vmatprep.mubr.f32.mxu0 %v1818
        %2035 = vmatmul.mubr.f32.gmra.mxu0 %v1689
        %v2036 = vpop.f32.mrf.mxu0
        %v2037 = vadd.f32 %v1912, %v2036
        %v2038 = vpop.f32.mrf.mxu0
        %v2039 = vadd.f32 %v1914, %v2038
        %2040 = vmatprep.mubr.f32.mxu0 %v1820
        %2041 = vmatmul.mubr.f32.gmra.mxu0 %v1690
        %v2042 = vpop.f32.mrf.mxu0
        %v2043 = vadd.f32 %v1918, %v2042
        %v2044 = vpop.f32.mrf.mxu0
        %v2045 = vadd.f32 %v1920, %v2044
        %2046 = vmatprep.mubr.f32.mxu0 %v1822
        %2047 = vmatmul.mubr.f32.gmra.mxu0 %v1691
        %v2048 = vpop.f32.mrf.mxu0
        %v2049 = vadd.f32 %v1924, %v2048
        %v2050 = vpop.f32.mrf.mxu0
        %v2051 = vadd.f32 %v1926, %v2050
        %2052 = vmatprep.mubr.f32.mxu0 %v1824
        %2053 = vmatmul.mubr.f32.gmra.mxu0 %v1692
        %v2054 = vpop.f32.mrf.mxu0
        %v2055 = vadd.f32 %v1930, %v2054
        %v2056 = vpop.f32.mrf.mxu0
        %v2057 = vadd.f32 %v1932, %v2056
        %2058 = vmatprep.mubr.f32.mxu0 %v1826
        %2059 = vmatmul.mubr.f32.gmra.mxu0 %v1693
        %v2060 = vpop.f32.mrf.mxu0
        %v2061 = vadd.f32 %v1936, %v2060
        %v2062 = vpop.f32.mrf.mxu0
        %v2063 = vadd.f32 %v1938, %v2062
        %2064 = vmatprep.mubr.f32.mxu0 %v1828
        %2065 = vmatmul.mubr.f32.gmra.mxu0 %v1694
        %v2066 = vpop.f32.mrf.mxu0
        %v2067 = vadd.f32 %v1942, %v2066
        %v2068 = vpop.f32.mrf.mxu0
        %v2069 = vadd.f32 %v1944, %v2068
        %2070 = vmatprep.mubr.f32.mxu0 %v1830
        %2071 = vmatmul.mubr.f32.gmra.mxu0 %v1695
        %v2072 = vpop.f32.mrf.mxu0
        %v2073 = vadd.f32 %v1948, %v2072
        %v2074 = vpop.f32.mrf.mxu0
        %v2075 = vadd.f32 %v1950, %v2074
        %2076 = vmatprep.mubr.f32.mxu0 %v1832
        %2077 = vmatmul.mubr.f32.gmra.mxu0 %v1696
        %v2078 = vpop.f32.mrf.mxu0
        %v2079 = vadd.f32 %v1954, %v2078
        %v2080 = vpop.f32.mrf.mxu0
        %v2081 = vadd.f32 %v1956, %v2080
        %2082 = vmatprep.mubr.f32.mxu0 %v1834
        %2083 = vmatmul.mubr.f32.gmra.mxu0 %v1697
        %v2084 = vpop.f32.mrf.mxu0
        %v2085 = vadd.f32 %v1960, %v2084
        %v2086 = vpop.f32.mrf.mxu0
        %v2087 = vadd.f32 %v1962, %v2086
        %2088 = vmatprep.mubr.f32.mxu0 %v1836
        %2089 = vmatmul.mubr.f32.gmra.mxu0 %v1698
        %v2090 = vpop.f32.mrf.mxu0
        %v2091 = vadd.f32 %v1966, %v2090
        %v2092 = vpop.f32.mrf.mxu0
        %v2093 = vadd.f32 %v1968, %v2092
        %2094 = vdwg.mxu0
        %v2095 = vmax.f32 %v2037, 0.0
        %v2096 = vmax.f32 %v2039, 0.0
        %v2097 = vmax.f32 %v2043, 0.0
        %v2098 = vmax.f32 %v2045, 0.0
        %v2099 = vmax.f32 %v2049, 0.0
        %v2100 = vmax.f32 %v2051, 0.0
        %v2101 = vmax.f32 %v2055, 0.0
        %v2102 = vmax.f32 %v2057, 0.0
        %v2103 = vmax.f32 %v2061, 0.0
        %v2104 = vmax.f32 %v2063, 0.0
        %v2105 = vmax.f32 %v2067, 0.0
        %v2106 = vmax.f32 %v2069, 0.0
        %v2107 = vmax.f32 %v2073, 0.0
        %v2108 = vmax.f32 %v2075, 0.0
        %v2109 = vmax.f32 %v2079, 0.0
        %v2110 = vmax.f32 %v2081, 0.0
        %v2111 = vmax.f32 %v2085, 0.0
        %v2112 = vmax.f32 %v2087, 0.0
        %v2113 = vmax.f32 %v2091, 0.0
        %v2114 = vmax.f32 %v2093, 0.0
        %v2115 = vld [vmem:[%s6] sm:$0xff]
        %v2116 = vld [vmem:[%s6 + $0x8] sm:$0xff]
        %v2117 = vld [vmem:[%s6 + $0x10] sm:$0xff]
        %v2118 = vld [vmem:[%s6 + $0x18] sm:$0xff]
        %v2119 = vld [vmem:[%s6 + $0x20] sm:$0xff]
        %v2120 = vld [vmem:[%s6 + $0x28] sm:$0xff]
        %v2121 = vld [vmem:[%s6 + $0x30] sm:$0xff]
        %v2122 = vld [vmem:[%s6 + $0x38] sm:$0xff]
        %v2123 = vld [vmem:[%s6 + $0x40] sm:$0xff]
        %v2124 = vld [vmem:[%s6 + $0x48] sm:$0xff]
        %v2125 = vld [vmem:[%s6 + $0x50] sm:$0xff]
        %v2126 = vld [vmem:[%s6 + $0x58] sm:$0xff]
        %v2127 = vld [vmem:[%s6 + $0x60] sm:$0xff]
        %v2128 = vld [vmem:[%s6 + $0x68] sm:$0xff]
        %v2129 = vld [vmem:[%s6 + $0x70] sm:$0xff]
        %v2130 = vld [vmem:[%s6 + $0x78] sm:$0xff]
        %v2131 = vld [vmem:[%s6 + $0x80] sm:$0xff]
        %v2132 = vld [vmem:[%s6 + $0x88] sm:$0xff]
        %v2133 = vld [vmem:[%s6 + $0x90] sm:$0xff]
        %v2134 = vld [vmem:[%s6 + $0x98] sm:$0xff]
        %v2136 = vsel %vm699, %v2096, 0
        %v2139 = vsel %vm699, %v2098, 0
        %v2142 = vsel %vm699, %v2100, 0
        %v2145 = vsel %vm699, %v2102, 0
        %v2148 = vsel %vm699, %v2104, 0
        %v2151 = vsel %vm699, %v2106, 0
        %v2154 = vsel %vm699, %v2108, 0
        %v2157 = vsel %vm699, %v2110, 0
        %v2160 = vsel %vm699, %v2112, 0
        %v2163 = vsel %vm699, %v2114, 0
        %2165 = vmatprep.subr.mxu0 0.0
        %2166 = vmatpush1.msra.mxu0 %v2130
        %2167 = vmatprep.subr.mxu0 0.0
        %2168 = vmatpush1.msra.mxu0 %v2129
        %2169 = vmatprep.subr.mxu0 0.0
        %2170 = vmatpush1.msra.mxu0 %v2128
        %2171 = vmatprep.subr.mxu0 0.0
        %2172 = vmatpush1.msra.mxu0 %v2127
        %2173 = vmatprep.subr.mxu0 0.0
        %2174 = vmatpush1.msra.mxu0 %v2126
        %2175 = vmatprep.subr.mxu0 0.0
        %2176 = vmatpush1.msra.mxu0 %v2125
        %2177 = vmatprep.subr.mxu0 0.0
        %2178 = vmatpush1.msra.mxu0 %v2124
        %2179 = vmatprep.subr.mxu0 0.0
        %2180 = vmatpush1.msra.mxu0 %v2123
        %2181 = vmatprep.subr.mxu0 0.0
        %2182 = vmatpush1.msra.mxu0 %v2122
        %2183 = vmatprep.subr.mxu0 0.0
        %2184 = vmatpush1.msra.mxu0 %v2121
        %2185 = vmatprep.subr.mxu0 0.0
        %2186 = vmatpush1.msra.mxu0 %v2120
        %2187 = vmatprep.subr.mxu0 0.0
        %2188 = vmatpush1.msra.mxu0 %v2119
        %2189 = vmatprep.subr.mxu0 0.0
        %2190 = vmatpush1.msra.mxu0 %v2118
        %2191 = vmatprep.subr.mxu0 0.0
        %2192 = vmatpush1.msra.mxu0 %v2117
        %2193 = vmatprep.subr.mxu0 0.0
        %2194 = vmatpush1.msra.mxu0 %v2116
        %2195 = vmatprep.subr.mxu0 0.0
        %2196 = vmatpush1.msra.mxu0 %v2115
        %2197 = vmatprep.subr.mxu0 0.0
        %2198 = vmatpush2.msra.mxu0 0.0
        %2199 = vmatprep.subr.mxu0 0.0
        %2200 = vmatpush2.msra.mxu0 0.0
        %2201 = vmatprep.subr.mxu0 0.0
        %2202 = vmatpush2.msra.mxu0 0.0
        %2203 = vmatprep.subr.mxu0 0.0
        %2204 = vmatpush2.msra.mxu0 0.0
        %2205 = vmatprep.subr.mxu0 0.0
        %2206 = vmatpush2.msra.mxu0 0.0
        %2207 = vmatprep.subr.mxu0 0.0
        %2208 = vmatpush2.msra.mxu0 0.0
        %2209 = vmatprep.subr.mxu0 0.0
        %2210 = vmatpush2.msra.mxu0 0.0
        %2211 = vmatprep.subr.mxu0 0.0
        %2212 = vmatpush2.msra.mxu0 0.0
        %2213 = vmatprep.subr.mxu0 0.0
        %2214 = vmatpush2.msra.mxu0 0.0
        %2215 = vmatprep.subr.mxu0 0.0
        %2216 = vmatpush2.msra.mxu0 0.0
        %2217 = vmatprep.subr.mxu0 0.0
        %2218 = vmatpush2.msra.mxu0 0.0
        %2219 = vmatprep.subr.mxu0 0.0
        %2220 = vmatpush2.msra.mxu0 0.0
        %2221 = vmatprep.subr.mxu0 0.0
        %2222 = vmatpush2.msra.mxu0 %v2134
        %2223 = vmatprep.subr.mxu0 0.0
        %2224 = vmatpush2.msra.mxu0 %v2133
        %2225 = vmatprep.subr.mxu0 0.0
        %2226 = vmatpush2.msra.mxu0 %v2132
        %2227 = vmatprep.subr.mxu0 0.0
        %2228 = vmatpush2.msra.mxu0 %v2131
        %2229 = vmatprep.mubr.f32.mxu0 %v2136
        %2230 = vmatmul.mubr.f32.gmra.mxu0 %v2095
        %v2231 = vpop.f32.mrf.mxu0
        %v2232 = vadd.f32 0.0, %v2231
        %v2233 = vpop.f32.mrf.mxu0
        %2234 = vmatprep.mubr.f32.mxu0 %v2139
        %2235 = vmatmul.mubr.f32.gmra.mxu0 %v2097
        %v2236 = vpop.f32.mrf.mxu0
        %v2237 = vadd.f32 0.0, %v2236
        %v2238 = vpop.f32.mrf.mxu0
        %2239 = vmatprep.mubr.f32.mxu0 %v2142
        %2240 = vmatmul.mubr.f32.gmra.mxu0 %v2099
        %v2241 = vpop.f32.mrf.mxu0
        %v2242 = vadd.f32 0.0, %v2241
        %v2243 = vpop.f32.mrf.mxu0
        %2244 = vmatprep.mubr.f32.mxu0 %v2145
        %2245 = vmatmul.mubr.f32.gmra.mxu0 %v2101
        %v2246 = vpop.f32.mrf.mxu0
        %v2247 = vadd.f32 0.0, %v2246
        %v2248 = vpop.f32.mrf.mxu0
        %2249 = vmatprep.mubr.f32.mxu0 %v2148
        %2250 = vmatmul.mubr.f32.gmra.mxu0 %v2103
        %v2251 = vpop.f32.mrf.mxu0
        %v2252 = vadd.f32 0.0, %v2251
        %v2253 = vpop.f32.mrf.mxu0
        %2254 = vmatprep.mubr.f32.mxu0 %v2151
        %2255 = vmatmul.mubr.f32.gmra.mxu0 %v2105
        %v2256 = vpop.f32.mrf.mxu0
        %v2257 = vadd.f32 0.0, %v2256
        %v2258 = vpop.f32.mrf.mxu0
        %2259 = vmatprep.mubr.f32.mxu0 %v2154
        %2260 = vmatmul.mubr.f32.gmra.mxu0 %v2107
        %v2261 = vpop.f32.mrf.mxu0
        %v2262 = vadd.f32 0.0, %v2261
        %v2263 = vpop.f32.mrf.mxu0
        %2264 = vmatprep.mubr.f32.mxu0 %v2157
        %2265 = vmatmul.mubr.f32.gmra.mxu0 %v2109
        %v2266 = vpop.f32.mrf.mxu0
        %v2267 = vadd.f32 0.0, %v2266
        %v2268 = vpop.f32.mrf.mxu0
        %2269 = vmatprep.mubr.f32.mxu0 %v2160
        %2270 = vmatmul.mubr.f32.gmra.mxu0 %v2111
        %v2271 = vpop.f32.mrf.mxu0
        %v2272 = vadd.f32 0.0, %v2271
        %v2273 = vpop.f32.mrf.mxu0
        %2274 = vmatprep.mubr.f32.mxu0 %v2163
        %2275 = vmatmul.mubr.f32.gmra.mxu0 %v2113
        %v2276 = vpop.f32.mrf.mxu0
        %v2277 = vadd.f32 0.0, %v2276
        %v2278 = vpop.f32.mrf.mxu0
        %2279 = vdwg.mxu0
        %v2280 = vadd.f32 %v2232, %v2237
        %v2281 = vmul.f32 %v2280, 0.5
        %v2282 = vadd.f32 %v2242, %v2247
        %v2283 = vmul.f32 %v2282, 0.5
        %v2284 = vadd.f32 %v2252, %v2257
        %v2285 = vmul.f32 %v2284, 0.5
        %v2286 = vadd.f32 %v2262, %v2267
        %v2287 = vmul.f32 %v2286, 0.5
        %v2288 = vadd.f32 %v2272, %v2277
        %v2289 = vmul.f32 %v2288, 0.5
        %2291 = vrot.lane.b32.xlu0 %v2283, 80
        %v2292 = vpop.permute.xlu0 %2291
        %2295 = vrot.lane.b32.xlu0 %v2285, 32
        %v2296 = vpop.permute.xlu0 %2295
        %2299 = vrot.lane.b32.xlu0 %v2287, 112
        %v2300 = vpop.permute.xlu0 %2299
        %2303 = vrot.lane.b32.xlu0 %v2289, 64
        %v2304 = vpop.permute.xlu0 %2303
        %v2306 = vsel %vm1688, %v2281, %v2292
        %v2307 = vsel %vm699, %v2292, %v2296
        %vm2308 = vcmask 916480
        %v2309 = vsel %vm2308, %v2307, %v2300
        %v2310 = vsel %vm728, %v2300, %v2304
        %v2311 = vld [vmem:[%s7] sm:$0xff]
        %v2312 = vld [vmem:[%s7 + $0x8] sm:$0xff]
        %v2313 = vld [vmem:[%s7 + $0x10] sm:$0xff]
        %v2314 = vld [vmem:[%s7 + $0x18] sm:$0xff]
        %v2315 = vld [vmem:[%s7 + $0x20] sm:$0xff]
        %v2316 = vld [vmem:[%s7 + $0x28] sm:$0xff]
        %v2317 = vld [vmem:[%s7 + $0x30] sm:$0xff]
        %v2318 = vld [vmem:[%s7 + $0x38] sm:$0xff]
        %v2319 = vld [vmem:[%s7 + $0x40] sm:$0xff]
        %v2320 = vld [vmem:[%s7 + $0x48] sm:$0xff]
        %v2321 = vld [vmem:[%s7 + $0x50] sm:$0xff]
        %v2322 = vld [vmem:[%s7 + $0x58] sm:$0xff]
        %v2323 = vld [vmem:[%s7 + $0x60] sm:$0xff]
        %v2324 = vld [vmem:[%s7 + $0x68] sm:$0xff]
        %v2325 = vld [vmem:[%s7 + $0x70] sm:$0xff]
        %v2326 = vld [vmem:[%s7 + $0x78] sm:$0xff]
        %v2327 = vld [vmem:[%s7 + $0x80] sm:$0xff]
        %v2328 = vld [vmem:[%s7 + $0x88] sm:$0xff]
        %v2329 = vld [vmem:[%s7 + $0x90] sm:$0xff]
        %v2330 = vld [vmem:[%s7 + $0x98] sm:$0xff]
        %v2331 = vld [vmem:[%s7 + $0xa0] sm:$0xff]
        %v2332 = vld [vmem:[%s7 + $0xa8] sm:$0xff]
        %v2333 = vld [vmem:[%s7 + $0xb0] sm:$0xff]
        %v2334 = vld [vmem:[%s7 + $0xb8] sm:$0xff]
        %v2335 = vld [vmem:[%s7 + $0xc0] sm:$0xff]
        %v2336 = vld [vmem:[%s7 + $0xc8] sm:$0xff]
        %v2337 = vld [vmem:[%s7 + $0xd0] sm:$0xff]
        %v2338 = vld [vmem:[%s7 + $0xd8] sm:$0xff]
        %v2339 = vld [vmem:[%s7 + $0xe0] sm:$0xff]
        %v2340 = vld [vmem:[%s7 + $0xe8] sm:$0xff]
        %v2341 = vld [vmem:[%s7 + $0xf0] sm:$0xff]
        %v2342 = vld [vmem:[%s7 + $0xf8] sm:$0xff]
        %v2343 = vld [vmem:[%s7 + $0x100] sm:$0xff]
        %v2344 = vld [vmem:[%s7 + $0x108] sm:$0xff]
        %v2345 = vld [vmem:[%s7 + $0x110] sm:$0xff]
        %v2346 = vld [vmem:[%s7 + $0x118] sm:$0xff]
        %v2347 = vld [vmem:[%s7 + $0x120] sm:$0xff]
        %v2348 = vld [vmem:[%s7 + $0x128] sm:$0xff]
        %v2349 = vld [vmem:[%s7 + $0x130] sm:$0xff]
        %v2350 = vld [vmem:[%s7 + $0x138] sm:$0xff]
        %v2351 = vld [vmem:[%s7 + $0x140] sm:$0xff]
        %v2352 = vld [vmem:[%s7 + $0x148] sm:$0xff]
        %v2353 = vld [vmem:[%s7 + $0x150] sm:$0xff]
        %v2354 = vld [vmem:[%s7 + $0x158] sm:$0xff]
        %v2355 = vld [vmem:[%s7 + $0x160] sm:$0xff]
        %v2356 = vld [vmem:[%s7 + $0x168] sm:$0xff]
        %v2357 = vld [vmem:[%s7 + $0x170] sm:$0xff]
        %v2358 = vld [vmem:[%s7 + $0x178] sm:$0xff]
        %v2359 = vld [vmem:[%s7 + $0x180] sm:$0xff]
        %v2360 = vld [vmem:[%s7 + $0x188] sm:$0xff]
        %v2361 = vld [vmem:[%s8] sm:$0x1]
        %v2363 = vlaneseq
        %v2364 = vshrl.u32 %v2363, 7
        %v2365 = vsub.s32 0, %v2364
        %v2366 = vrot.slane %v2361, %v2365
        %vm2368 = vcmask 130048
        %v2369 = vsel %vm2368, %v2304, 0
        %2371 = vmatprep.subr.mxu0 0.0
        %2372 = vmatpush1.msra.mxu0 %v2326
        %2373 = vmatprep.subr.mxu0 0.0
        %2374 = vmatpush1.msra.mxu0 %v2325
        %2375 = vmatprep.subr.mxu0 0.0
        %2376 = vmatpush1.msra.mxu0 %v2324
        %2377 = vmatprep.subr.mxu0 0.0
        %2378 = vmatpush1.msra.mxu0 %v2323
        %2379 = vmatprep.subr.mxu0 0.0
        %2380 = vmatpush1.msra.mxu0 %v2322
        %2381 = vmatprep.subr.mxu0 0.0
        %2382 = vmatpush1.msra.mxu0 %v2321
        %2383 = vmatprep.subr.mxu0 0.0
        %2384 = vmatpush1.msra.mxu0 %v2320
        %2385 = vmatprep.subr.mxu0 0.0
        %2386 = vmatpush1.msra.mxu0 %v2319
        %2387 = vmatprep.subr.mxu0 0.0
        %2388 = vmatpush1.msra.mxu0 %v2318
        %2389 = vmatprep.subr.mxu0 0.0
        %2390 = vmatpush1.msra.mxu0 %v2317
        %2391 = vmatprep.subr.mxu0 0.0
        %2392 = vmatpush1.msra.mxu0 %v2316
        %2393 = vmatprep.subr.mxu0 0.0
        %2394 = vmatpush1.msra.mxu0 %v2315
        %2395 = vmatprep.subr.mxu0 0.0
        %2396 = vmatpush1.msra.mxu0 %v2314
        %2397 = vmatprep.subr.mxu0 0.0
        %2398 = vmatpush1.msra.mxu0 %v2313
        %2399 = vmatprep.subr.mxu0 0.0
        %2400 = vmatpush1.msra.mxu0 %v2312
        %2401 = vmatprep.subr.mxu0 0.0
        %2402 = vmatpush1.msra.mxu0 %v2311
        %2403 = vmatprep.subr.mxu0 0.0
        %2404 = vmatpush2.msra.mxu0 %v2342
        %2405 = vmatprep.subr.mxu0 0.0
        %2406 = vmatpush2.msra.mxu0 %v2341
        %2407 = vmatprep.subr.mxu0 0.0
        %2408 = vmatpush2.msra.mxu0 %v2340
        %2409 = vmatprep.subr.mxu0 0.0
        %2410 = vmatpush2.msra.mxu0 %v2339
        %2411 = vmatprep.subr.mxu0 0.0
        %2412 = vmatpush2.msra.mxu0 %v2338
        %2413 = vmatprep.subr.mxu0 0.0
        %2414 = vmatpush2.msra.mxu0 %v2337
        %2415 = vmatprep.subr.mxu0 0.0
        %2416 = vmatpush2.msra.mxu0 %v2336
        %2417 = vmatprep.subr.mxu0 0.0
        %2418 = vmatpush2.msra.mxu0 %v2335
        %2419 = vmatprep.subr.mxu0 0.0
        %2420 = vmatpush2.msra.mxu0 %v2334
        %2421 = vmatprep.subr.mxu0 0.0
        %2422 = vmatpush2.msra.mxu0 %v2333
        %2423 = vmatprep.subr.mxu0 0.0
        %2424 = vmatpush2.msra.mxu0 %v2332
        %2425 = vmatprep.subr.mxu0 0.0
        %2426 = vmatpush2.msra.mxu0 %v2331
        %2427 = vmatprep.subr.mxu0 0.0
        %2428 = vmatpush2.msra.mxu0 %v2330
        %2429 = vmatprep.subr.mxu0 0.0
        %2430 = vmatpush2.msra.mxu0 %v2329
        %2431 = vmatprep.subr.mxu0 0.0
        %2432 = vmatpush2.msra.mxu0 %v2328
        %2433 = vmatprep.subr.mxu0 0.0
        %2434 = vmatpush2.msra.mxu0 %v2327
        %2435 = vmatprep.mubr.f32.mxu0 %v2309
        %2436 = vmatmul.mubr.f32.gmra.mxu0 %v2306
        %v2437 = vpop.f32.mrf.mxu0
        %v2438 = vadd.f32 %v2366, %v2437
        %v2439 = vpop.f32.mrf.mxu0
        %2440 = vdwg.mxu0
        %2441 = vmatprep.subr.mxu0 0.0
        %2442 = vmatpush1.msra.mxu0 %v2358
        %2443 = vmatprep.subr.mxu0 0.0
        %2444 = vmatpush1.msra.mxu0 %v2357
        %2445 = vmatprep.subr.mxu0 0.0
        %2446 = vmatpush1.msra.mxu0 %v2356
        %2447 = vmatprep.subr.mxu0 0.0
        %2448 = vmatpush1.msra.mxu0 %v2355
        %2449 = vmatprep.subr.mxu0 0.0
        %2450 = vmatpush1.msra.mxu0 %v2354
        %2451 = vmatprep.subr.mxu0 0.0
        %2452 = vmatpush1.msra.mxu0 %v2353
        %2453 = vmatprep.subr.mxu0 0.0
        %2454 = vmatpush1.msra.mxu0 %v2352
        %2455 = vmatprep.subr.mxu0 0.0
        %2456 = vmatpush1.msra.mxu0 %v2351
        %2457 = vmatprep.subr.mxu0 0.0
        %2458 = vmatpush1.msra.mxu0 %v2350
        %2459 = vmatprep.subr.mxu0 0.0
        %2460 = vmatpush1.msra.mxu0 %v2349
        %2461 = vmatprep.subr.mxu0 0.0
        %2462 = vmatpush1.msra.mxu0 %v2348
        %2463 = vmatprep.subr.mxu0 0.0
        %2464 = vmatpush1.msra.mxu0 %v2347
        %2465 = vmatprep.subr.mxu0 0.0
        %2466 = vmatpush1.msra.mxu0 %v2346
        %2467 = vmatprep.subr.mxu0 0.0
        %2468 = vmatpush1.msra.mxu0 %v2345
        %2469 = vmatprep.subr.mxu0 0.0
        %2470 = vmatpush1.msra.mxu0 %v2344
        %2471 = vmatprep.subr.mxu0 0.0
        %2472 = vmatpush1.msra.mxu0 %v2343
        %2473 = vmatprep.subr.mxu0 0.0
        %2474 = vmatpush2.msra.mxu0 0.0
        %2475 = vmatprep.subr.mxu0 0.0
        %2476 = vmatpush2.msra.mxu0 0.0
        %2477 = vmatprep.subr.mxu0 0.0
        %2478 = vmatpush2.msra.mxu0 0.0
        %2479 = vmatprep.subr.mxu0 0.0
        %2480 = vmatpush2.msra.mxu0 0.0
        %2481 = vmatprep.subr.mxu0 0.0
        %2482 = vmatpush2.msra.mxu0 0.0
        %2483 = vmatprep.subr.mxu0 0.0
        %2484 = vmatpush2.msra.mxu0 0.0
        %2485 = vmatprep.subr.mxu0 0.0
        %2486 = vmatpush2.msra.mxu0 0.0
        %2487 = vmatprep.subr.mxu0 0.0
        %2488 = vmatpush2.msra.mxu0 0.0
        %2489 = vmatprep.subr.mxu0 0.0
        %2490 = vmatpush2.msra.mxu0 0.0
        %2491 = vmatprep.subr.mxu0 0.0
        %2492 = vmatpush2.msra.mxu0 0.0
        %2493 = vmatprep.subr.mxu0 0.0
        %2494 = vmatpush2.msra.mxu0 0.0
        %2495 = vmatprep.subr.mxu0 0.0
        %2496 = vmatpush2.msra.mxu0 0.0
        %2497 = vmatprep.subr.mxu0 0.0
        %2498 = vmatpush2.msra.mxu0 0.0
        %2499 = vmatprep.subr.mxu0 0.0
        %2500 = vmatpush2.msra.mxu0 0.0
        %2501 = vmatprep.subr.mxu0 0.0
        %2502 = vmatpush2.msra.mxu0 %v2360
        %2503 = vmatprep.subr.mxu0 0.0
        %2504 = vmatpush2.msra.mxu0 %v2359
        %2505 = vmatprep.mubr.f32.mxu0 %v2369
        %2506 = vmatmul.mubr.f32.gmra.mxu0 %v2310
        %v2507 = vpop.f32.mrf.mxu0
        %v2508 = vadd.f32 %v2438, %v2507
        %v2509 = vpop.f32.mrf.mxu0
        %2510 = vdwg.mxu0
        %v2511 = vmax.f32 %v2508, 0.0
        %v2512 = vld [vmem:[%s9] sm:$0xff]
        %v2513 = vld [vmem:[%s9 + $0x8] sm:$0xff]
        %v2514 = vld [vmem:[%s9 + $0x10] sm:$0xff]
        %v2515 = vld [vmem:[%s9 + $0x18] sm:$0xff]
        %v2516 = vld [vmem:[%s9 + $0x20] sm:$0xff]
        %v2517 = vld [vmem:[%s9 + $0x28] sm:$0xff]
        %v2518 = vld [vmem:[%s9 + $0x30] sm:$0xff]
        %v2519 = vld [vmem:[%s9 + $0x38] sm:$0xff]
        %v2520 = vld [vmem:[%s9 + $0x40] sm:$0xff]
        %v2521 = vld [vmem:[%s9 + $0x48] sm:$0xff]
        %v2522 = vld [vmem:[%s9 + $0x50] sm:$0xff]
        %v2523 = vld [vmem:[%s9 + $0x58] sm:$0xff]
        %v2524 = vld [vmem:[%s9 + $0x60] sm:$0xff]
        %v2525 = vld [vmem:[%s9 + $0x68] sm:$0xff]
        %v2526 = vld [vmem:[%s9 + $0x70] sm:$0xff]
        %v2527 = vld [vmem:[%s10] sm:$0x1]
        %v2529 = vlaneseq
        %v2530 = vshrl.u32 %v2529, 7
        %v2531 = vsub.s32 0, %v2530
        %v2532 = vrot.slane %v2527, %v2531
        %vm2534 = vcmask 982016
        %v2536 = vsel %vm2534, %v2511, 0
        %2538 = vmatprep.subr.mxu0 0.0
        %2539 = vmatpush1.msra.mxu0 0.0
        %2540 = vmatprep.subr.mxu0 0.0
        %2541 = vmatpush1.msra.mxu0 %v2526
        %2542 = vmatprep.subr.mxu0 0.0
        %2543 = vmatpush1.msra.mxu0 %v2525
        %2544 = vmatprep.subr.mxu0 0.0
        %2545 = vmatpush1.msra.mxu0 %v2524
        %2546 = vmatprep.subr.mxu0 0.0
        %2547 = vmatpush1.msra.mxu0 %v2523
        %2548 = vmatprep.subr.mxu0 0.0
        %2549 = vmatpush1.msra.mxu0 %v2522
        %2550 = vmatprep.subr.mxu0 0.0
        %2551 = vmatpush1.msra.mxu0 %v2521
        %2552 = vmatprep.subr.mxu0 0.0
        %2553 = vmatpush1.msra.mxu0 %v2520
        %2554 = vmatprep.subr.mxu0 0.0
        %2555 = vmatpush1.msra.mxu0 %v2519
        %2556 = vmatprep.subr.mxu0 0.0
        %2557 = vmatpush1.msra.mxu0 %v2518
        %2558 = vmatprep.subr.mxu0 0.0
        %2559 = vmatpush1.msra.mxu0 %v2517
        %2560 = vmatprep.subr.mxu0 0.0
        %2561 = vmatpush1.msra.mxu0 %v2516
        %2562 = vmatprep.subr.mxu0 0.0
        %2563 = vmatpush1.msra.mxu0 %v2515
        %2564 = vmatprep.subr.mxu0 0.0
        %2565 = vmatpush1.msra.mxu0 %v2514
        %2566 = vmatprep.subr.mxu0 0.0
        %2567 = vmatpush1.msra.mxu0 %v2513
        %2568 = vmatprep.subr.mxu0 0.0
        %2569 = vmatpush1.msra.mxu0 %v2512
        %2570 = vmatprep.subr.mxu0 0.0
        %2571 = vmatpush2.msra.mxu0 0.0
        %2572 = vmatprep.subr.mxu0 0.0
        %2573 = vmatpush2.msra.mxu0 0.0
        %2574 = vmatprep.subr.mxu0 0.0
        %2575 = vmatpush2.msra.mxu0 0.0
        %2576 = vmatprep.subr.mxu0 0.0
        %2577 = vmatpush2.msra.mxu0 0.0
        %2578 = vmatprep.subr.mxu0 0.0
        %2579 = vmatpush2.msra.mxu0 0.0
        %2580 = vmatprep.subr.mxu0 0.0
        %2581 = vmatpush2.msra.mxu0 0.0
        %2582 = vmatprep.subr.mxu0 0.0
        %2583 = vmatpush2.msra.mxu0 0.0
        %2584 = vmatprep.subr.mxu0 0.0
        %2585 = vmatpush2.msra.mxu0 0.0
        %2586 = vmatprep.subr.mxu0 0.0
        %2587 = vmatpush2.msra.mxu0 0.0
        %2588 = vmatprep.subr.mxu0 0.0
        %2589 = vmatpush2.msra.mxu0 0.0
        %2590 = vmatprep.subr.mxu0 0.0
        %2591 = vmatpush2.msra.mxu0 0.0
        %2592 = vmatprep.subr.mxu0 0.0
        %2593 = vmatpush2.msra.mxu0 0.0
        %2594 = vmatprep.subr.mxu0 0.0
        %2595 = vmatpush2.msra.mxu0 0.0
        %2596 = vmatprep.subr.mxu0 0.0
        %2597 = vmatpush2.msra.mxu0 0.0
        %2598 = vmatprep.subr.mxu0 0.0
        %2599 = vmatpush2.msra.mxu0 0.0
        %2600 = vmatprep.subr.mxu0 0.0
        %2601 = vmatpush2.msra.mxu0 0.0
        %2602 = vmatprep.mubr.f32.mxu0 0.0
        %2603 = vmatmul.mubr.f32.gmra.mxu0 %v2536
        %v2604 = vpop.f32.mrf.mxu0
        %v2605 = vadd.f32 %v2532, %v2604
        %v2606 = vpop.f32.mrf.mxu0
        %2607 = vdwg.mxu0
        %v2608 = vtanh.pop %v2605
        %v2609 = vmul.f32 %v2608, 1.7519
        %2610 = vst.msk [vmem:[%s379] sm:$0xff] %vm1656, %v2609
        %s2611 = sand.u32 %s269, 1
        %s2612 = scalar_lea.sflag [#allocation3], %s2611
        %s2613 = sand.u32 %s269, 1
        %s2614 = smul.addr %s2613, 8
        %s2615 = scalar_lea.vmem [#allocation2], %s2614
        // Predicated region
        $region65: #{lenet5_forward.1} parent=63 // pred_check
          %p2616 = pneg %p279
        $region66: #{lenet5_forward.1} parent=63 // pred_check_branch
          %2618 = sbr.rel (%p2616) target = $region68
        $region67: #{lenet5_forward.1} parent=63 // pred_region
          %s2620 = ssub.s32 128, 128
          %2621 = vsyncadd %s2612, %s2620
          %s2622 = smul.addr %s25, 128
          %s2623 = scalar_lea.hbm %s11, %s2622
          %s2625 = sshll.u32 %s2615, 4
          %s2626 = int_to_ptr.vmem [resolvable:$true] %s2625
          %2628 = dma.vmem_to_hbm [thread:$0]  %s2626, 128, %s2623, %s2612
        $region68: #{lenet5_forward.1} parent=63 // pred_fallthru
          _
      $region64: #{lenet5_forward.1} parent=5 // pred_fallthru
        _
      %p2629 = scmp.le.s32.totalorder 2, %s20
      // Predicated region
      $region69: #{lenet5_forward.1} parent=5 // pred_check
        %p2630 = pneg %p2629
      $region70: #{lenet5_forward.1} parent=5 // pred_check_branch
        %2632 = sbr.rel (%p2630) target = $region72
      $region71: #{lenet5_forward.1} parent=5 // pred_region
        %s2633 = ssub.s32 %s20, 2
        // Predicated region
        $region73: #{lenet5_forward.1} parent=71 // pred_check
          %p2634 = pneg %p285
        $region74: #{lenet5_forward.1} parent=71 // pred_check_branch
          %2636 = sbr.rel (%p2634) target = $region76
        $region75: #{lenet5_forward.1} parent=71 // pred_region
          %s2637 = sand.u32 %s270, 1
          %s2638 = scalar_lea.sflag [#allocation3], %s2637
          %s2639 = sand.u32 %s270, 1
          %s2640 = smul.addr %s2639, 8
          %s2641 = scalar_lea.vmem [#allocation2], %s2640
          %2642 = dma.done %s2638, 128
        $region76: #{lenet5_forward.1} parent=71 // pred_fallthru
          _
      $region72: #{lenet5_forward.1} parent=5 // pred_fallthru
        _
    $region6: #{lenet5_forward.1} parent=1 // loop_footer
      %s24 = sadd.s32 1, %s20
    $region7: #{lenet5_forward.1} parent=1 // loop_footer_branch
      %19 = sbr.rel target = $region3
    $region8: #{lenet5_forward.1} parent=1 // loop_exit
      _
    %2643 = vsyncpa [#allocation3], 1
    %s2644 = scalar_lea.sflag [#allocation3], 1
    %2645 = vsyncpa %s2644, 1

</llo_original>
